<compile_context>
chip_gen: v6e
topology: v6e:2x2x1
jax: 0.10.0
libtpu: 0.0.40
codegen_flags: <defaults>
</compile_context>

<pallas_src>
import numpy as np
import jax
import jax.numpy as jnp
from jax.experimental import pallas as pl
from jax.experimental.pallas import tpu as pltpu

EPS = 1e-5


# ----------------------------------------------------------------------------- glue helpers
def get_groupsize(channels, min_channels, gamma, M):
    """Faithful copy of PackedBottleNeck.get_groupsize."""
    final_gamma = gamma
    groups = gamma * M
    while (channels // groups < min_channels or channels % groups != 0) and final_gamma > 1:
        final_gamma -= 1
        groups = final_gamma * M
    return groups


def _dense_1x1(w, groups):
    """torch (Cout, Cin//groups, 1, 1) grouped 1x1 conv weight -> dense (Cin, Cout) block-diag."""
    w = np.asarray(w)[:, :, 0, 0]
    cout, cin_g = w.shape
    cin = cin_g * groups
    out_g = cout // groups
    dense = np.zeros((cin, cout), np.float32)
    for g in range(groups):
        dense[g * cin_g:(g + 1) * cin_g, g * out_g:(g + 1) * out_g] = w[g * out_g:(g + 1) * out_g].T
    return jnp.asarray(dense)


def _dense_3x3(w, groups):
    """torch (Cout, Cin//groups, 3, 3) grouped conv weight -> (9, Cin, Cout) block-diag per tap."""
    w = np.asarray(w)
    cout, cin_g, kh_, kw_ = w.shape
    cin = cin_g * groups
    out_g = cout // groups
    dense = np.zeros((kh_ * kw_, cin, cout), np.float32)
    for kh in range(kh_):
        for kw in range(kw_):
            for g in range(groups):
                dense[kh * kw_ + kw,
                      g * cin_g:(g + 1) * cin_g,
                      g * out_g:(g + 1) * out_g] = w[g * out_g:(g + 1) * out_g, :, kh, kw].T
    return jnp.asarray(dense)


def init_params(key, in_ch, out_ch, stride, alpha, M, gamma, min_channels):
    """Deterministic synthetic parameters with the exact shapes of PackedBottleNeck.__init__."""
    in_c = in_ch * alpha
    out_c = out_ch * alpha
    cb = out_c // 4
    g_conv1 = M
    g_conv2 = get_groupsize(cb, min_channels, gamma, M)
    g_conv3 = get_groupsize(cb, min_channels, gamma, M)
    g_sc = get_groupsize(in_c, min_channels, gamma, M)

    ks = jax.random.split(key, 12)

    def nrm(k, shape, scale=1.0):
        return jax.random.normal(k, shape, jnp.float32) * scale

    w1 = nrm(ks[0], (cb, in_c // g_conv1, 1, 1), 0.2)
    w2 = nrm(ks[1], (cb, cb // g_conv2, 3, 3), 0.2)
    w3 = nrm(ks[2], (out_c, cb // g_conv3, 1, 1), 0.2)

    p = {
        "w1d": _dense_1x1(w1, g_conv1),          # (Cin,  Cb)
        "w2d": _dense_3x3(w2, g_conv2),          # (9, Cb, Cb)
        "w3d": _dense_1x1(w3, g_conv3),          # (Cb, Cout)
        "g1": 1.0 + 0.1 * nrm(ks[3], (1, cb)),
        "b1": 0.1 * nrm(ks[4], (1, cb)),
        "g2": 1.0 + 0.1 * nrm(ks[5], (1, cb)),
        "b2": 0.1 * nrm(ks[6], (1, cb)),
        "g3": 1.0 + 0.1 * nrm(ks[7], (1, out_c)),
        "b3": 0.1 * nrm(ks[8], (1, out_c)),
        "_torch": {"w1": w1, "w2": w2, "w3": w3,
                   "g_conv1": g_conv1, "g_conv2": g_conv2, "g_conv3": g_conv3},
    }
    if stride != 1 or in_c != out_c:
        ws = nrm(ks[9], (out_c, in_c // g_sc, 1, 1), 0.2)
        p["wsd"] = _dense_1x1(ws, g_sc)          # (Cin, Cout)
        p["gs"] = 1.0 + 0.1 * nrm(ks[10], (1, out_c))
        p["bs"] = 0.1 * nrm(ks[11], (1, out_c))
        p["_torch"].update({"ws": ws, "g_sc": g_sc})
    return p


# ----------------------------------------------------------------------------- Pallas forward
def packed_bottleneck_pallas(x_nchw, p, stride):
    f32, bf16 = jnp.float32, jnp.bfloat16

    N, Cin, H, W = map(int, x_nchw.shape)
    Cb = int(p["w2d"].shape[1])
    Cout = int(p["w3d"].shape[1])
    has_sc = "wsd" in p
    assert H % stride == 0 and W % stride == 0, "spatial dims must be divisible by stride"
    Ho, Wo = H // stride, W // stride
    HW, HoWo = H * W, Ho * Wo

    # ---- wrapper-side layout plumbing: NHWC, UNPADDED channels, bf16 conv inputs ----
    x_nhwc = jnp.transpose(x_nchw, (0, 2, 3, 1)).astype(f32)   # f32 copy (identity shortcut add)
    x_bf16 = x_nhwc.astype(bf16)                               # conv input (halves stage-1 DMA)

    w1 = p["w1d"].astype(bf16)                                  # (Cin, Cb)
    w2 = p["w2d"].astype(bf16)                                  # (9, Cb, Cb)
    w3 = p["w3d"].astype(bf16)                                  # (Cb, Cout)
    if has_sc:
        ws = p["wsd"].astype(bf16)                              # (Cin, Cout)

    # ---- BlockSpec helpers: grid over batch images, full (unpadded) trailing dims ----
    def img_spec(h, w, c):
        return pl.BlockSpec((1, h, w, c), lambda n: (n, 0, 0, 0))

    def mat_spec(shape):
        nd = len(shape)
        return pl.BlockSpec(shape, lambda n, _nd=nd: (0,) * _nd)

    def vec_spec(c):
        return pl.BlockSpec((1, c), lambda n: (0, 0))

    def st_spec(c):
        return pl.BlockSpec((1, 2, c), lambda n: (n, 0, 0))

    def nbytes(shape, dt):
        return int(np.prod(shape)) * int(np.dtype(dt).itemsize)

    def cparams(per_step_block_bytes, scratch_bytes=0):
        # Estimate the double-buffered working set; only raise vmem_limit_bytes when the
        # smallest default scoped budget (v5e, 16 MiB) would not suffice.
        need = 2 * per_step_block_bytes + scratch_bytes + (1 << 20)
        kw = dict(dimension_semantics=("parallel",))
        if need > (14 << 20):
            kw["vmem_limit_bytes"] = int(min(2 * need, 100 << 20))
        return pltpu.CompilerParams(**kw)

    def write_stats(st_ref, h, count):
        # Per-image centered partials (mean_i, M2_i) from the f32 accumulator (before the
        # bf16 downcast of the activation); combined via Chan's formula in the wrapper.
        c = h.shape[1]
        mean_i = jnp.sum(h, axis=0, keepdims=True) * (1.0 / count)
        m2_i = jnp.sum(jnp.square(h - mean_i), axis=0, keepdims=True)
        st_ref[:, 0:1, :] = mean_i.reshape(1, 1, c)
        st_ref[:, 1:2, :] = m2_i.reshape(1, 1, c)

    def bn_affine(st, count, gamma, beta):
        # Chan parallel combine (equal per-image counts) + fused scale/shift: y = h*a + d.
        mean_i = st[:, 0, :]                                    # (N, C)
        m2_i = st[:, 1, :]
        mean = jnp.mean(mean_i, axis=0)                         # (C,)
        m2 = jnp.sum(m2_i, axis=0) + count * jnp.sum(jnp.square(mean_i - mean[None, :]), axis=0)
        var = jnp.maximum(m2 / (count * N), 0.0)
        g = jnp.asarray(gamma, f32).reshape(-1)
        b = jnp.asarray(beta, f32).reshape(-1)
        a = g * jax.lax.rsqrt(var + EPS)
        d = b - mean * a
        return a.reshape(1, -1), d.reshape(1, -1)

    # ------------------------------------------------ stage 1: conv1 (+ shortcut conv) + stats
    def stage1_kernel(*refs):
        if has_sc:
            x_ref, w1_ref, ws_ref, h1_ref, st1_ref, sc_ref, stsc_ref = refs
        else:
            x_ref, w1_ref, h1_ref, st1_ref = refs
        xb = x_ref[...].reshape(HW, Cin)                        # bf16, lanes = real channels
        h1 = jnp.dot(xb, w1_ref[...], preferred_element_type=f32)
        write_stats(st1_ref, h1, float(HW))
        h1_ref[...] = h1.astype(bf16).reshape(1, H, W, Cb)      # bf16 inter-stage HBM tensor
        if has_sc:
            if stride == 1:
                xs = xb
            else:
                xs = x_ref[:, pl.ds(0, Ho, stride=stride), pl.ds(0, Wo, stride=stride), :]
                xs = xs.reshape(HoWo, Cin)
            sc = jnp.dot(xs, ws_ref[...], preferred_element_type=f32)
            write_stats(stsc_ref, sc, float(HoWo))
            sc_ref[...] = sc.astype(bf16).reshape(1, Ho, Wo, Cout)

    s1_in = [x_bf16, w1] + ([ws] if has_sc else [])
    s1_in_specs = [img_spec(H, W, Cin), mat_spec((Cin, Cb))] + \
                  ([mat_spec((Cin, Cout))] if has_sc else [])
    s1_out_shape = (jax.ShapeDtypeStruct((N, H, W, Cb), bf16),
                    jax.ShapeDtypeStruct((N, 2, Cb), f32))
    s1_out_specs = (img_spec(H, W, Cb), st_spec(Cb))
    s1_bytes = (nbytes((H, W, Cin), bf16) + nbytes((Cin, Cb), bf16)
                + nbytes((H, W, Cb), bf16) + nbytes((2, Cb), f32))
    if has_sc:
        s1_out_shape += (jax.ShapeDtypeStruct((N, Ho, Wo, Cout), bf16),
                         jax.ShapeDtypeStruct((N, 2, Cout), f32))
        s1_out_specs += (img_spec(Ho, Wo, Cout), st_spec(Cout))
        s1_bytes += (nbytes((Cin, Cout), bf16) + nbytes((Ho, Wo, Cout), bf16)
                     + nbytes((2, Cout), f32))

    s1_out = pl.pallas_call(
        stage1_kernel, out_shape=s1_out_shape, grid=(N,),
        in_specs=s1_in_specs, out_specs=s1_out_specs,
        compiler_params=cparams(s1_bytes))(*s1_in)
    if has_sc:
        h1raw, st1, scraw, stsc = s1_out
    else:
        h1raw, st1 = s1_out

    a1, d1 = bn_affine(st1, float(HW), p["g1"], p["b1"])

    # ------------------------------------------------ stage 2: BN1+ReLU, 3x3 conv (9 dots) + stats
    def stage2_kernel(h1_ref, a_ref, d_ref, w2_ref, h2_ref, st2_ref, pad_ref):
        h1 = h1_ref[...].reshape(HW, Cb)
        y1 = jnp.maximum(h1 * a_ref[...] + d_ref[...], 0.0).astype(bf16)   # fused BN+ReLU -> bf16
        # bf16 halo-padded scratch: zero only the 1-pixel halo; interior written exactly once.
        pad_ref[:, 0:1, :, :] = jnp.zeros((1, 1, W + 2, Cb), bf16)
        pad_ref[:, H + 1:H + 2, :, :] = jnp.zeros((1, 1, W + 2, Cb), bf16)
        pad_ref[:, 1:H + 1, 0:1, :] = jnp.zeros((1, H, 1, Cb), bf16)
        pad_ref[:, 1:H + 1, W + 1:W + 2, :] = jnp.zeros((1, H, 1, Cb), bf16)
        pad_ref[:, 1:H + 1, 1:W + 1, :] = y1.reshape(1, H, W, Cb)
        # 3x3 conv: 9 accumulated MXU dots straight from the bf16 scratch (no im2col concat).
        acc = None
        for kh in range(3):
            for kw in range(3):
                if stride == 1:
                    tap = pad_ref[:, kh:kh + Ho, kw:kw + Wo, :]
                else:
                    tap = pad_ref[:, pl.ds(kh, Ho, stride=stride),
                                  pl.ds(kw, Wo, stride=stride), :]
                tap = tap.reshape(HoWo, Cb)
                part = jnp.dot(tap, w2_ref[kh * 3 + kw], preferred_element_type=f32)
                acc = part if acc is None else acc + part
        write_stats(st2_ref, acc, float(HoWo))
        h2_ref[...] = acc.astype(bf16).reshape(1, Ho, Wo, Cb)

    s2_bytes = (nbytes((H, W, Cb), bf16) + 2 * nbytes((1, Cb), f32)
                + nbytes((9, Cb, Cb), bf16)
                + nbytes((Ho, Wo, Cb), bf16) + nbytes((2, Cb), f32))
    h2raw, st2 = pl.pallas_call(
        stage2_kernel,
        out_shape=(jax.ShapeDtypeStruct((N, Ho, Wo, Cb), bf16),
                   jax.ShapeDtypeStruct((N, 2, Cb), f32)),
        grid=(N,),
        in_specs=[img_spec(H, W, Cb), vec_spec(Cb), vec_spec(Cb), mat_spec((9, Cb, Cb))],
        out_specs=(img_spec(Ho, Wo, Cb), st_spec(Cb)),
        scratch_shapes=[pltpu.VMEM((1, H + 2, W + 2, Cb), bf16)],
        compiler_params=cparams(s2_bytes, nbytes((1, H + 2, W + 2, Cb), bf16)),
    )(h1raw, a1, d1, w2)

    a2, d2 = bn_affine(st2, float(HoWo), p["g2"], p["b2"])

    # ------------------------------------------------ stage 3: BN2+ReLU, conv3 + stats
    def stage3_kernel(h2_ref, a_ref, d_ref, w3_ref, h3_ref, st3_ref):
        h2 = h2_ref[...].reshape(HoWo, Cb)
        y2 = jnp.maximum(h2 * a_ref[...] + d_ref[...], 0.0).astype(bf16)
        h3 = jnp.dot(y2, w3_ref[...], preferred_element_type=f32)
        write_stats(st3_ref, h3, float(HoWo))
        h3_ref[...] = h3.astype(bf16).reshape(1, Ho, Wo, Cout)

    s3_bytes = (nbytes((Ho, Wo, Cb), bf16) + 2 * nbytes((1, Cb), f32)
                + nbytes((Cb, Cout), bf16)
                + nbytes((Ho, Wo, Cout), bf16) + nbytes((2, Cout), f32))
    h3raw, st3 = pl.pallas_call(
        stage3_kernel,
        out_shape=(jax.ShapeDtypeStruct((N, Ho, Wo, Cout), bf16),
                   jax.ShapeDtypeStruct((N, 2, Cout), f32)),
        grid=(N,),
        in_specs=[img_spec(Ho, Wo, Cb), vec_spec(Cb), vec_spec(Cb), mat_spec((Cb, Cout))],
        out_specs=(img_spec(Ho, Wo, Cout), st_spec(Cout)),
        compiler_params=cparams(s3_bytes))(h2raw, a2, d2, w3)

    a3, d3 = bn_affine(st3, float(HoWo), p["g3"], p["b3"])

    # ------------------------------------------------ stage 4: BN3 + shortcut + final ReLU
    if has_sc:
        asc, dsc = bn_affine(stsc, float(HoWo), p["gs"], p["bs"])

        def stage4_kernel(h3_ref, a3_ref, d3_ref, sc_ref, as_ref, ds_ref, o_ref):
            h3 = h3_ref[...].reshape(HoWo, Cout)
            sc = sc_ref[...].reshape(HoWo, Cout)
            out = h3 * a3_ref[...] + d3_ref[...] + (sc * as_ref[...] + ds_ref[...])
            o_ref[...] = jnp.maximum(out, 0.0).reshape(1, Ho, Wo, Cout)

        s4_in = (h3raw, a3, d3, scraw, asc, dsc)
        s4_specs = [img_spec(Ho, Wo, Cout), vec_spec(Cout), vec_spec(Cout),
                    img_spec(Ho, Wo, Cout), vec_spec(Cout), vec_spec(Cout)]
        s4_bytes = (2 * nbytes((Ho, Wo, Cout), bf16) + 4 * nbytes((1, Cout), f32)
                    + nbytes((Ho, Wo, Cout), f32))
    else:
        # identity shortcut only exists when stride == 1 and Cin == Cout; add the f32 x.
        assert stride == 1 and Cin == Cout

        def stage4_kernel(h3_ref, a3_ref, d3_ref, x_ref, o_ref):
            h3 = h3_ref[...].reshape(HoWo, Cout)
            xs = x_ref[...].reshape(HoWo, Cout)
            o_ref[...] = jnp.maximum(h3 * a3_ref[...] + d3_ref[...] + xs,
                                     0.0).reshape(1, Ho, Wo, Cout)

        s4_in = (h3raw, a3, d3, x_nhwc)
        s4_specs = [img_spec(Ho, Wo, Cout), vec_spec(Cout), vec_spec(Cout),
                    img_spec(H, W, Cin)]
        s4_bytes = (nbytes((Ho, Wo, Cout), bf16) + 2 * nbytes((1, Cout), f32)
                    + nbytes((H, W, Cin), f32) + nbytes((Ho, Wo, Cout), f32))

    out_nhwc = pl.pallas_call(
        stage4_kernel,
        out_shape=jax.ShapeDtypeStruct((N, Ho, Wo, Cout), f32),
        grid=(N,),
        in_specs=s4_specs,
        out_specs=img_spec(Ho, Wo, Cout),
        compiler_params=cparams(s4_bytes))(*s4_in)

    # back to PyTorch NCHW (no channel un-pad pass needed: channels stored unpadded)
    return jnp.transpose(out_nhwc, (0, 3, 1, 2))


# ----------------------------------------------------------------------------- pure-JAX reference
def reference_forward(x_nchw, p, stride, bf16_inputs=False):
    """Reference forward.  bf16_inputs=True mirrors the kernel's mixed precision (bf16 conv
    inputs + bf16 inter-stage storage, f32 accumulation / BN stats); False = full f32."""
    t = p["_torch"]
    f32 = jnp.float32

    def q(v):  # models the kernel's bf16 HBM storage of conv outputs
        return v.astype(jnp.bfloat16).astype(f32) if bf16_inputs else v

    def conv(x, w, s, pad, groups):
        if bf16_inputs:
            x = x.astype(jnp.bfloat16)
            w = w.astype(jnp.bfloat16)
        return jax.lax.conv_general_dilated(
            x, w, window_strides=(s, s), padding=[(pad, pad), (pad, pad)],
            dimension_numbers=("NCHW", "OIHW", "NCHW"),
            feature_group_count=groups, precision=jax.lax.Precision.HIGHEST,
            preferred_element_type=f32)

    def bn(xraw, g, b):
        # stats from the f32 conv output; affine applied (like the kernel) as y = q(x)*a + d
        mean = jnp.mean(xraw, axis=(0, 2, 3), keepdims=True)
        var = jnp.mean(jnp.square(xraw - mean), axis=(0, 2, 3), keepdims=True)
        a = jnp.reshape(g, (1, -1, 1, 1)) * jax.lax.rsqrt(var + EPS)
        d = jnp.reshape(b, (1, -1, 1, 1)) - mean * a
        return q(xraw) * a + d

    out = jnp.maximum(bn(conv(x_nchw, t["w1"], 1, 0, t["g_conv1"]), p["g1"], p["b1"]), 0.0)
    out = jnp.maximum(bn(conv(out, t["w2"], stride, 1, t["g_conv2"]), p["g2"], p["b2"]), 0.0)
    out = bn(conv(out, t["w3"], 1, 0, t["g_conv3"]), p["g3"], p["b3"])
    if "wsd" in p:
        sc = bn(conv(x_nchw, t["ws"], stride, 0, t["g_sc"]), p["gs"], p["bs"])
    else:
        sc = x_nchw
    return jnp.maximum(out + sc, 0.0)


# ----------------------------------------------------------------------------- main
if __name__ == "__main__":
    key = jax.random.PRNGKey(0)

    configs = [
        # (in_ch, out_ch, stride, alpha, M, gamma, minChannels, N, H, W)
        (4, 8, 1, 2, 2, 1, 2, 2, 16, 16),   # conv shortcut     (in_c=8  -> out_c=16)
        (8, 8, 1, 2, 2, 1, 2, 2, 16, 16),   # identity shortcut (in_c == out_c == 16)
    ]

    for idx, (in_ch, out_ch, stride, alpha, M, gamma, minc, N, H, W) in enumerate(configs):
        kx, kp = jax.random.split(jax.random.fold_in(key, idx))
        in_c = in_ch * alpha
        x = jax.random.normal(kx, (N, in_c, H, W), jnp.float32)     # NCHW, like PyTorch
        params = init_params(kp, in_ch, out_ch, stride, alpha, M, gamma, minc)

        y = jax.block_until_ready(packed_bottleneck_pallas(x, params, stride))

        y_mix = reference_forward(x, params, stride, bf16_inputs=True)   # matched precision
        y_f32 = reference_forward(x, params, stride, bf16_inputs=False)  # full f32 semantics
        assert y.shape == y_f32.shape, (y.shape, y_f32.shape)
        # tight check vs a reference with the same bf16 mixed precision as the kernel
        assert bool(jnp.allclose(y, y_mix, rtol=5e-3, atol=5e-3)), \
            "Pallas kernel mismatch vs mixed-precision reference"
        # looser sanity bound vs the pure-f32 reference (accounts for bf16 inputs/intermediates)
        assert bool(jnp.allclose(y, y_f32, rtol=1e-1, atol=1e-1)), \
            "Pallas kernel mismatch vs f32 reference"

    print("KERNEL_OK")
</pallas_src>

<mosaic_0001>
module attributes {stable_mosaic.version = 11 : i64} {
  func.func @stage1_kernel(%arg0: i32, %arg1: memref<1x16x16x8xbf16, #tpu.memory_space<vmem>>, %arg2: memref<8x4xbf16, #tpu.memory_space<vmem>>, %arg3: memref<8x16xbf16, #tpu.memory_space<vmem>>, %arg4: memref<1x16x16x4xbf16, #tpu.memory_space<vmem>>, %arg5: memref<1x2x4xf32, #tpu.memory_space<vmem>>, %arg6: memref<1x16x16x16xbf16, #tpu.memory_space<vmem>>, %arg7: memref<1x2x16xf32, #tpu.memory_space<vmem>>) attributes {dimension_semantics = [#tpu.dimension_semantics<parallel>], iteration_bounds = array<i64: 2>, scalar_prefetch = 0 : i64, scratch_operands = 0 : i64, tpu.core_type = #tpu.core_type<tc>, window_params = [{transform_indices = @transform_0, window_bounds = array<i64: 1, 16, 16, 8>}, {pipeline_mode = #tpu.pipeline_mode<synchronous>, transform_indices = @transform_1, window_bounds = array<i64: 8, 4>}, {pipeline_mode = #tpu.pipeline_mode<synchronous>, transform_indices = @transform_2, window_bounds = array<i64: 8, 16>}, {transform_indices = @transform_3, window_bounds = array<i64: 1, 16, 16, 4>}, {transform_indices = @transform_4, window_bounds = array<i64: 1, 2, 4>}, {transform_indices = @transform_5, window_bounds = array<i64: 1, 16, 16, 16>}, {transform_indices = @transform_6, window_bounds = array<i64: 1, 2, 16>}]} {
    %c0 = arith.constant 0 : index
    %c0_0 = arith.constant 0 : index
    %c0_1 = arith.constant 0 : index
    %c0_2 = arith.constant 0 : index
    %0 = vector.load %arg1[%c0, %c0_0, %c0_1, %c0_2] : memref<1x16x16x8xbf16, #tpu.memory_space<vmem>>, vector<1x16x16x8xbf16>
    %1 = vector.shape_cast %0 : vector<1x16x16x8xbf16> to vector<256x8xbf16>
    %c0_3 = arith.constant 0 : index
    %c0_4 = arith.constant 0 : index
    %2 = vector.load %arg2[%c0_3, %c0_4] : memref<8x4xbf16, #tpu.memory_space<vmem>>, vector<8x4xbf16>
    %cst = arith.constant dense<0.000000e+00> : vector<256x4xf32>
    %3 = tpu.matmul %1, %2, %cst {dimension_numbers = #tpu.dot_dimension_numbers<[1], [0], [0], [1], [0, 0, 1, 1], [], []>} : vector<256x8xbf16>, vector<8x4xbf16>, vector<256x4xf32> -> vector<256x4xf32>
    %cst_5 = arith.constant dense<0.000000e+00> : vector<4xf32>
    %4 = vector.multi_reduction <add>, %3, %cst_5 [0] : vector<256x4xf32> to vector<4xf32>
    %5 = vector.shape_cast %4 : vector<4xf32> to vector<1x4xf32>
    %cst_6 = arith.constant 3.906250e-03 : f32
    %6 = vector.broadcast %cst_6 : f32 to vector<1x4xf32>
    %7 = arith.mulf %5, %6 : vector<1x4xf32>
    %8 = vector.broadcast %7 : vector<1x4xf32> to vector<256x4xf32>
    %9 = arith.subf %3, %8 : vector<256x4xf32>
    %10 = arith.mulf %9, %9 : vector<256x4xf32>
    %cst_7 = arith.constant dense<0.000000e+00> : vector<4xf32>
    %11 = vector.multi_reduction <add>, %10, %cst_7 [0] : vector<256x4xf32> to vector<4xf32>
    %12 = vector.shape_cast %11 : vector<4xf32> to vector<1x4xf32>
    %13 = vector.shape_cast %7 : vector<1x4xf32> to vector<1x1x4xf32>
    %c0_8 = arith.constant 0 : index
    %c0_9 = arith.constant 0 : index
    %c0_10 = arith.constant 0 : index
    %14 = vector.load %arg5[%c0_8, %c0_9, %c0_10] : memref<1x2x4xf32, #tpu.memory_space<vmem>>, vector<1x1x4xf32>
    tpu.vector_store %arg5[%c0_8, %c0_9, %c0_10], %13 {strides = array<i32>} : memref<1x2x4xf32, #tpu.memory_space<vmem>>, vector<1x1x4xf32>,
    %15 = vector.shape_cast %12 : vector<1x4xf32> to vector<1x1x4xf32>
    %c0_11 = arith.constant 0 : index
    %c1 = arith.constant 1 : index
    %c0_12 = arith.constant 0 : index
    %16 = vector.load %arg5[%c0_11, %c1, %c0_12] : memref<1x2x4xf32, #tpu.memory_space<vmem>>, vector<1x1x4xf32>
    tpu.vector_store %arg5[%c0_11, %c1, %c0_12], %15 {strides = array<i32>} : memref<1x2x4xf32, #tpu.memory_space<vmem>>, vector<1x1x4xf32>,
    %17 = arith.truncf %3 : vector<256x4xf32> to vector<256x4xbf16>
    %18 = vector.shape_cast %17 : vector<256x4xbf16> to vector<1x16x16x4xbf16>
    %c0_13 = arith.constant 0 : index
    %c0_14 = arith.constant 0 : index
    %c0_15 = arith.constant 0 : index
    %c0_16 = arith.constant 0 : index
    %19 = vector.load %arg4[%c0_13, %c0_14, %c0_15, %c0_16] : memref<1x16x16x4xbf16, #tpu.memory_space<vmem>>, vector<1x16x16x4xbf16>
    tpu.vector_store %arg4[%c0_13, %c0_14, %c0_15, %c0_16], %18 {strides = array<i32>} : memref<1x16x16x4xbf16, #tpu.memory_space<vmem>>, vector<1x16x16x4xbf16>,
    %c0_17 = arith.constant 0 : index
    %c0_18 = arith.constant 0 : index
    %20 = vector.load %arg3[%c0_17, %c0_18] : memref<8x16xbf16, #tpu.memory_space<vmem>>, vector<8x16xbf16>
    %cst_19 = arith.constant dense<0.000000e+00> : vector<256x16xf32>
    %21 = tpu.matmul %1, %20, %cst_19 {dimension_numbers = #tpu.dot_dimension_numbers<[1], [0], [0], [1], [0, 0, 1, 1], [], []>} : vector<256x8xbf16>, vector<8x16xbf16>, vector<256x16xf32> -> vector<256x16xf32>
    %cst_20 = arith.constant dense<0.000000e+00> : vector<16xf32>
    %22 = vector.multi_reduction <add>, %21, %cst_20 [0] : vector<256x16xf32> to vector<16xf32>
    %23 = vector.shape_cast %22 : vector<16xf32> to vector<1x16xf32>
    %cst_21 = arith.constant 3.906250e-03 : f32
    %24 = vector.broadcast %cst_21 : f32 to vector<1x16xf32>
    %25 = arith.mulf %23, %24 : vector<1x16xf32>
    %26 = vector.broadcast %25 : vector<1x16xf32> to vector<256x16xf32>
    %27 = arith.subf %21, %26 : vector<256x16xf32>
    %28 = arith.mulf %27, %27 : vector<256x16xf32>
    %cst_22 = arith.constant dense<0.000000e+00> : vector<16xf32>
    %29 = vector.multi_reduction <add>, %28, %cst_22 [0] : vector<256x16xf32> to vector<16xf32>
    %30 = vector.shape_cast %29 : vector<16xf32> to vector<1x16xf32>
    %31 = vector.shape_cast %25 : vector<1x16xf32> to vector<1x1x16xf32>
    %c0_23 = arith.constant 0 : index
    %c0_24 = arith.constant 0 : index
    %c0_25 = arith.constant 0 : index
    %32 = vector.load %arg7[%c0_23, %c0_24, %c0_25] : memref<1x2x16xf32, #tpu.memory_space<vmem>>, vector<1x1x16xf32>
    tpu.vector_store %arg7[%c0_23, %c0_24, %c0_25], %31 {strides = array<i32>} : memref<1x2x16xf32, #tpu.memory_space<vmem>>, vector<1x1x16xf32>,
    %33 = vector.shape_cast %30 : vector<1x16xf32> to vector<1x1x16xf32>
    %c0_26 = arith.constant 0 : index
    %c1_27 = arith.constant 1 : index
    %c0_28 = arith.constant 0 : index
    %34 = vector.load %arg7[%c0_26, %c1_27, %c0_28] : memref<1x2x16xf32, #tpu.memory_space<vmem>>, vector<1x1x16xf32>
    tpu.vector_store %arg7[%c0_26, %c1_27, %c0_28], %33 {strides = array<i32>} : memref<1x2x16xf32, #tpu.memory_space<vmem>>, vector<1x1x16xf32>,
    %35 = arith.truncf %21 : vector<256x16xf32> to vector<256x16xbf16>
    %36 = vector.shape_cast %35 : vector<256x16xbf16> to vector<1x16x16x16xbf16>
    %c0_29 = arith.constant 0 : index
    %c0_30 = arith.constant 0 : index
    %c0_31 = arith.constant 0 : index
    %c0_32 = arith.constant 0 : index
    %37 = vector.load %arg6[%c0_29, %c0_30, %c0_31, %c0_32] : memref<1x16x16x16xbf16, #tpu.memory_space<vmem>>, vector<1x16x16x16xbf16>
    tpu.vector_store %arg6[%c0_29, %c0_30, %c0_31, %c0_32], %36 {strides = array<i32>} : memref<1x16x16x16xbf16, #tpu.memory_space<vmem>>, vector<1x16x16x16xbf16>,
    return
  }
  func.func @transform_0(%arg0: i32) -> (i32, i32, i32, i32) {
    %c0_i32 = arith.constant 0 : i32
    %c0_i32_0 = arith.constant 0 : i32
    %c0_i32_1 = arith.constant 0 : i32
    %c0_i32_2 = arith.constant 0 : i32
    return %arg0, %c0_i32, %c0_i32_0, %c0_i32_1 : i32, i32, i32, i32
  }
  func.func @transform_1(%arg0: i32) -> (i32, i32) {
    %c0_i32 = arith.constant 0 : i32
    %c0_i32_0 = arith.constant 0 : i32
    %c0_i32_1 = arith.constant 0 : i32
    return %c0_i32, %c0_i32_0 : i32, i32
  }
  func.func @transform_2(%arg0: i32) -> (i32, i32) {
    %c0_i32 = arith.constant 0 : i32
    %c0_i32_0 = arith.constant 0 : i32
    %c0_i32_1 = arith.constant 0 : i32
    return %c0_i32, %c0_i32_0 : i32, i32
  }
  func.func @transform_3(%arg0: i32) -> (i32, i32, i32, i32) {
    %c0_i32 = arith.constant 0 : i32
    %c0_i32_0 = arith.constant 0 : i32
    %c0_i32_1 = arith.constant 0 : i32
    %c0_i32_2 = arith.constant 0 : i32
    return %arg0, %c0_i32, %c0_i32_0, %c0_i32_1 : i32, i32, i32, i32
  }
  func.func @transform_4(%arg0: i32) -> (i32, i32, i32) {
    %c0_i32 = arith.constant 0 : i32
    %c0_i32_0 = arith.constant 0 : i32
    %c0_i32_1 = arith.constant 0 : i32
    return %arg0, %c0_i32, %c0_i32_0 : i32, i32, i32
  }
  func.func @transform_5(%arg0: i32) -> (i32, i32, i32, i32) {
    %c0_i32 = arith.constant 0 : i32
    %c0_i32_0 = arith.constant 0 : i32
    %c0_i32_1 = arith.constant 0 : i32
    %c0_i32_2 = arith.constant 0 : i32
    return %arg0, %c0_i32, %c0_i32_0, %c0_i32_1 : i32, i32, i32, i32
  }
  func.func @transform_6(%arg0: i32) -> (i32, i32, i32) {
    %c0_i32 = arith.constant 0 : i32
    %c0_i32_0 = arith.constant 0 : i32
    %c0_i32_1 = arith.constant 0 : i32
    return %arg0, %c0_i32, %c0_i32_0 : i32, i32, i32
  }
}

</mosaic_0001>

<llo_original>
// kernel: tpu_custom_call.1
$region0: #{tpu_custom_call.1}
  #allocation0 [shape = 'u32[]', space=smem, size = 0x4, offset = 0x4, fixed_abs, tag = 'smem constant byte address 0x4 - core index']
  #allocation1 [shape = 'u32[144,128]{1,0:T(1,128)}', space=vmem, size = 0x12000, scoped, tag = 'internal scratch']
  %s0 = inlined_call_operand.vmem [shape: bf16[2,16,16,8], index: 0, kind: input, shape index: {}]
  %s1 = inlined_call_operand.vmem [shape: bf16[8,4], index: 1, kind: input, shape index: {}]
  %s2 = inlined_call_operand.vmem [shape: bf16[8,16], index: 2, kind: input, shape index: {}]
  %s3 = inlined_call_operand.vmem [shape: bf16[2,16,16,4], index: 3, kind: output, shape index: {0}]
  %s4 = inlined_call_operand.hbm [shape: f32[2,2,4], index: 4, kind: output, shape index: {1}]
  %s5 = inlined_call_operand.hbm [shape: bf16[2,16,16,16], index: 5, kind: output, shape index: {2}]
  %s6 = inlined_call_operand.hbm [shape: f32[2,2,16], index: 6, kind: output, shape index: {3}]
  %7 = xla_tuple %s3, %s4, %s5, %s6
  %s8 = sld [smem:[#allocation0]]
  $region69: #{tpu_custom_call.1} parent=0
    _
  %s10 = ssub.s32 1, %s8
  %s11 = scalar_select 0, %s10, %s8
  $region1: #{tpu_custom_call.1} parent=0
    #allocation2 [shape = 'u8[2048]{0}', space=vmem, size = 0x800, scoped, tag = 'output window, operand 1']
    #allocation3 [shape = 's32[2]{0}', space=sflag, size = 0x8, scoped, tag = 'scoped memory for tpu_custom_call.1']
    #allocation4 [shape = 'u8[131072]{0}', space=vmem, size = 0x20000, scoped, tag = 'output window, operand 2']
    #allocation5 [shape = 's32[2]{0}', space=sflag, size = 0x8, scoped, tag = 'scoped memory for tpu_custom_call.1']
    #allocation6 [shape = 'u8[2048]{0}', space=vmem, size = 0x800, scoped, tag = 'output window, operand 3']
    %12 = vsyncpa [#allocation3], 0
    %s13 = scalar_lea.sflag [#allocation3], 1
    %14 = vsyncpa %s13, 0
    %15 = vsyncpa [#allocation5], 0
    %s16 = scalar_lea.sflag [#allocation5], 1
    %17 = vsyncpa %s16, 0
    loop: start=0, step=1, limit=4
    $region2: #{tpu_custom_call.1} parent=1 // loop_pre_header
      _
    $region3: #{tpu_custom_call.1} parent=1 // loop_header
      %s19 = sphi 0, %s23
      %p20 = scmp.ge.s32.totalorder %s19, 4
      %s29 = sphi 0, %s31
      %s32 = sphi 0, %s29
      %s33 = sphi 0, %s32
      %s49 = sphi 0, %s33
      %s53 = sphi 0, %s53
      %s55 = sphi 0, %s53
      %s56 = sphi 0, %s55
      %s70 = sphi 0, %s56
      %s74 = sphi 0, %s74
      %s76 = sphi 0, %s74
      %s77 = sphi 0, %s76
      %s91 = sphi 0, %s77
      %s97 = sphi 0, %s99
      %s100 = sphi 0, %s97
      %s101 = sphi 0, %s100
      %s117 = sphi 0, %s101
      %s123 = sphi 0, %s125
      %s126 = sphi 0, %s123
      %s127 = sphi 0, %s126
      %s143 = sphi 0, %s127
      %s149 = sphi 0, %s151
      %s152 = sphi 0, %s149
      %s153 = sphi 0, %s152
      %s169 = sphi 0, %s153
      %s175 = sphi 0, %s177
      %s178 = sphi 0, %s175
      %s179 = sphi 0, %s178
      %s195 = sphi 0, %s179
    $region4: #{tpu_custom_call.1} parent=1 // loop_header_branch
      %22 = sbr.rel (%p20) target = $region8
    $region5: #{tpu_custom_call.1} parent=1 // loop_body
      %s24 = ssub.s32 %s19, 1
      %s25 = ssub.s32 %s19, 2
      %s26 = sadd.s32 %s19, 1
      %s27 = ssub.s32 %s19, %s26
      %p28 = scmp.eq.s32.totalorder %s27, 0
      %s30 = sadd.s32 %s29, 1
      %s31 = scalar_select %p28, %s29, %s30
      %p34 = pneg %p28
      %p35 = scmp.eq.s32.totalorder %s19, 1
      %p36 = por %p34, %p35
      %p37 = scmp.ne.s32.totalorder %s29, %s32
      %p38 = scmp.eq.s32.totalorder %s19, 0
      %p39 = por %p37, %p38
      %p40 = scmp.ne.s32.totalorder %s29, %s32
      %p41 = scmp.eq.s32.totalorder %s24, 1
      %p42 = por %p40, %p41
      %p43 = scmp.ne.s32.totalorder %s32, %s33
      %p44 = scmp.eq.s32.totalorder %s24, 0
      %p45 = por %p43, %p44
      %p46 = scmp.ne.s32.totalorder %s32, %s33
      %p47 = scmp.eq.s32.totalorder %s25, 1
      %p48 = por %p46, %p47
      %p50 = scmp.ne.s32.totalorder %s33, %s49
      %p51 = scmp.eq.s32.totalorder %s25, 0
      %p52 = por %p50, %p51
      %s54 = sadd.s32 %s53, 1
      %p57 = scmp.eq.s32.totalorder %s19, 1
      %p58 = scmp.ne.s32.totalorder %s53, %s55
      %p59 = scmp.eq.s32.totalorder %s19, 0
      %p60 = por %p58, %p59
      %p61 = scmp.ne.s32.totalorder %s53, %s55
      %p62 = scmp.eq.s32.totalorder %s24, 1
      %p63 = por %p61, %p62
      %p64 = scmp.ne.s32.totalorder %s55, %s56
      %p65 = scmp.eq.s32.totalorder %s24, 0
      %p66 = por %p64, %p65
      %p67 = scmp.ne.s32.totalorder %s55, %s56
      %p68 = scmp.eq.s32.totalorder %s25, 1
      %p69 = por %p67, %p68
      %p71 = scmp.ne.s32.totalorder %s56, %s70
      %p72 = scmp.eq.s32.totalorder %s25, 0
      %p73 = por %p71, %p72
      %s75 = sadd.s32 %s74, 1
      %p78 = scmp.eq.s32.totalorder %s19, 1
      %p79 = scmp.ne.s32.totalorder %s74, %s76
      %p80 = scmp.eq.s32.totalorder %s19, 0
      %p81 = por %p79, %p80
      %p82 = scmp.ne.s32.totalorder %s74, %s76
      %p83 = scmp.eq.s32.totalorder %s24, 1
      %p84 = por %p82, %p83
      %p85 = scmp.ne.s32.totalorder %s76, %s77
      %p86 = scmp.eq.s32.totalorder %s24, 0
      %p87 = por %p85, %p86
      %p88 = scmp.ne.s32.totalorder %s76, %s77
      %p89 = scmp.eq.s32.totalorder %s25, 1
      %p90 = por %p88, %p89
      %p92 = scmp.ne.s32.totalorder %s77, %s91
      %p93 = scmp.eq.s32.totalorder %s25, 0
      %p94 = por %p92, %p93
      %s95 = ssub.s32 %s19, %s26
      %p96 = scmp.eq.s32.totalorder %s95, 0
      %s98 = sadd.s32 %s97, 1
      %s99 = scalar_select %p96, %s97, %s98
      %p102 = pneg %p96
      %p103 = scmp.eq.s32.totalorder %s19, 1
      %p104 = por %p102, %p103
      %p105 = scmp.ne.s32.totalorder %s97, %s100
      %p106 = scmp.eq.s32.totalorder %s19, 0
      %p107 = por %p105, %p106
      %p108 = scmp.ne.s32.totalorder %s97, %s100
      %p109 = scmp.eq.s32.totalorder %s24, 1
      %p110 = por %p108, %p109
      %p111 = scmp.ne.s32.totalorder %s100, %s101
      %p112 = scmp.eq.s32.totalorder %s24, 0
      %p113 = por %p111, %p112
      %p114 = scmp.ne.s32.totalorder %s100, %s101
      %p115 = scmp.eq.s32.totalorder %s25, 1
      %p116 = por %p114, %p115
      %p118 = scmp.ne.s32.totalorder %s101, %s117
      %p119 = scmp.eq.s32.totalorder %s25, 0
      %p120 = por %p118, %p119
      %s121 = ssub.s32 %s19, %s26
      %p122 = scmp.eq.s32.totalorder %s121, 0
      %s124 = sadd.s32 %s123, 1
      %s125 = scalar_select %p122, %s123, %s124
      %p128 = pneg %p122
      %p129 = scmp.eq.s32.totalorder %s19, 1
      %p130 = por %p128, %p129
      %p131 = scmp.ne.s32.totalorder %s123, %s126
      %p132 = scmp.eq.s32.totalorder %s19, 0
      %p133 = por %p131, %p132
      %p134 = scmp.ne.s32.totalorder %s123, %s126
      %p135 = scmp.eq.s32.totalorder %s24, 1
      %p136 = por %p134, %p135
      %p137 = scmp.ne.s32.totalorder %s126, %s127
      %p138 = scmp.eq.s32.totalorder %s24, 0
      %p139 = por %p137, %p138
      %p140 = scmp.ne.s32.totalorder %s126, %s127
      %p141 = scmp.eq.s32.totalorder %s25, 1
      %p142 = por %p140, %p141
      %p144 = scmp.ne.s32.totalorder %s127, %s143
      %p145 = scmp.eq.s32.totalorder %s25, 0
      %p146 = por %p144, %p145
      %s147 = ssub.s32 %s19, %s26
      %p148 = scmp.eq.s32.totalorder %s147, 0
      %s150 = sadd.s32 %s149, 1
      %s151 = scalar_select %p148, %s149, %s150
      %p154 = pneg %p148
      %p155 = scmp.eq.s32.totalorder %s19, 1
      %p156 = por %p154, %p155
      %p157 = scmp.ne.s32.totalorder %s149, %s152
      %p158 = scmp.eq.s32.totalorder %s19, 0
      %p159 = por %p157, %p158
      %p160 = scmp.ne.s32.totalorder %s149, %s152
      %p161 = scmp.eq.s32.totalorder %s24, 1
      %p162 = por %p160, %p161
      %p163 = scmp.ne.s32.totalorder %s152, %s153
      %p164 = scmp.eq.s32.totalorder %s24, 0
      %p165 = por %p163, %p164
      %p166 = scmp.ne.s32.totalorder %s152, %s153
      %p167 = scmp.eq.s32.totalorder %s25, 1
      %p168 = por %p166, %p167
      %p170 = scmp.ne.s32.totalorder %s153, %s169
      %p171 = scmp.eq.s32.totalorder %s25, 0
      %p172 = por %p170, %p171
      %s173 = ssub.s32 %s19, %s26
      %p174 = scmp.eq.s32.totalorder %s173, 0
      %s176 = sadd.s32 %s175, 1
      %s177 = scalar_select %p174, %s175, %s176
      %p180 = pneg %p174
      %p181 = scmp.eq.s32.totalorder %s19, 1
      %p182 = por %p180, %p181
      %p183 = scmp.ne.s32.totalorder %s175, %s178
      %p184 = scmp.eq.s32.totalorder %s19, 0
      %p185 = por %p183, %p184
      %p186 = scmp.ne.s32.totalorder %s175, %s178
      %p187 = scmp.eq.s32.totalorder %s24, 1
      %p188 = por %p186, %p187
      %p189 = scmp.ne.s32.totalorder %s178, %s179
      %p190 = scmp.eq.s32.totalorder %s24, 0
      %p191 = por %p189, %p190
      %p192 = scmp.ne.s32.totalorder %s178, %s179
      %p193 = scmp.eq.s32.totalorder %s25, 1
      %p194 = por %p192, %p193
      %p196 = scmp.ne.s32.totalorder %s179, %s195
      %p197 = scmp.eq.s32.totalorder %s25, 0
      %p198 = por %p196, %p197
      %p199 = scmp.le.s32.totalorder 1, %s19
      %p200 = scmp.lt.s32.totalorder %s19, 3
      %p201 = pnand %p199, %p200
      %p202 = pneg %p201
      // Predicated region
      $region9: #{tpu_custom_call.1} parent=5 // pred_check
        _
      $region10: #{tpu_custom_call.1} parent=5 // pred_check_branch
        %204 = sbr.rel (%p201) target = $region12
      $region11: #{tpu_custom_call.1} parent=5 // pred_region
        %s205 = ssub.s32 %s19, 1
        // Predicated region
        $region13: #{tpu_custom_call.1} parent=11 // pred_check
          %p206 = pneg %p66
        $region14: #{tpu_custom_call.1} parent=11 // pred_check_branch
          %208 = sbr.rel (%p206) target = $region16
        $region15: #{tpu_custom_call.1} parent=11 // pred_region
          _
        $region16: #{tpu_custom_call.1} parent=11 // pred_fallthru
          _
        // Predicated region
        $region17: #{tpu_custom_call.1} parent=11 // pred_check
          %p209 = pneg %p87
        $region18: #{tpu_custom_call.1} parent=11 // pred_check_branch
          %211 = sbr.rel (%p209) target = $region20
        $region19: #{tpu_custom_call.1} parent=11 // pred_region
          _
        $region20: #{tpu_custom_call.1} parent=11 // pred_fallthru
          _
      $region12: #{tpu_custom_call.1} parent=5 // pred_fallthru
        _
      %p212 = scmp.lt.s32.totalorder %s19, 2
      // Predicated region
      $region21: #{tpu_custom_call.1} parent=5 // pred_check
        %p213 = pneg %p212
      $region22: #{tpu_custom_call.1} parent=5 // pred_check_branch
        %215 = sbr.rel (%p213) target = $region24
      $region23: #{tpu_custom_call.1} parent=5 // pred_region
        // Predicated region
        $region25: #{tpu_custom_call.1} parent=23 // pred_check
          %p216 = pneg %p39
        $region26: #{tpu_custom_call.1} parent=23 // pred_check_branch
          %218 = sbr.rel (%p216) target = $region28
        $region27: #{tpu_custom_call.1} parent=23 // pred_region
          %p219 = scmp.lt.s32.totalorder %s19, 1
          %s220 = scalar_select %p219, %s19, 1
          %s221 = smul.addr %s220, 32
          %s222 = smul.addr %s221, 4
          %s223 = scalar_lea.vmem %s0, %s222
        $region28: #{tpu_custom_call.1} parent=23 // pred_fallthru
          _
      $region24: #{tpu_custom_call.1} parent=5 // pred_fallthru
        _
      %p224 = scmp.le.s32.totalorder 1, %s19
      %p225 = scmp.lt.s32.totalorder %s19, 3
      %p226 = pnand %p224, %p225
      %p227 = pneg %p226
      // Predicated region
      $region29: #{tpu_custom_call.1} parent=5 // pred_check
        _
      $region30: #{tpu_custom_call.1} parent=5 // pred_check_branch
        %229 = sbr.rel (%p226) target = $region32
      $region31: #{tpu_custom_call.1} parent=5 // pred_region
        %s230 = ssub.s32 %s19, 1
        %p231 = scmp.lt.s32.totalorder %s24, 1
        %s232 = scalar_select %p231, %s24, 1
        %s233 = smul.addr %s232, 32
        %s234 = smul.addr %s233, 4
        %s235 = scalar_lea.vmem %s0, %s234
        %p236 = pneg %p45
        %p237 = pneg %p42
        %p238 = pneg %p66
        %p239 = pneg %p63
        %p240 = pneg %p87
        %p241 = pneg %p84
        %p242 = pneg %p113
        %p243 = pneg %p110
        %p244 = scmp.lt.s32.totalorder %s24, 1
        %s245 = scalar_select %p244, %s24, 1
        %s246 = smul.addr %s245, 32
        %s247 = smul.addr %s246, 4
        %s248 = scalar_lea.vmem %s3, %s247
        %p249 = pneg %p139
        %p250 = pneg %p136
        %s251 = sand.u32 %s126, 1
        %s252 = scalar_lea.sflag [#allocation3], %s251
        %s253 = sand.u32 %s126, 1
        %s254 = smul.addr %s253, 2
        %s255 = scalar_lea.vmem [#allocation2], %s254
        %p256 = pneg %p165
        %p257 = pneg %p162
        %s258 = sand.u32 %s24, 1
        %s259 = scalar_lea.sflag [#allocation5], %s258
        %s260 = sand.u32 %s152, 1
        %s261 = smul.addr %s260, 128
        %s262 = scalar_lea.vmem [#allocation4], %s261
        %p263 = pneg %p191
        %p264 = pneg %p188
        %s265 = sand.u32 %s24, 1
        %s266 = scalar_lea.sflag [#allocation5], %s265
        %s267 = sand.u32 %s178, 1
        %s268 = smul.addr %s267, 2
        %s269 = scalar_lea.vmem [#allocation6], %s268
        %p270 = scmp.lt.s32.totalorder %s24, 1
        %s271 = scalar_select %p270, %s24, 1
        %s272 = smul.addr %s271, 32
        %s273 = smul.addr %s272, 4
        %s274 = scalar_lea.vmem %s0, %s273
        %p275 = scmp.lt.s32.totalorder %s24, 1
        %s276 = scalar_select %p275, %s24, 1
        %s277 = smul.addr %s276, 32
        %s278 = smul.addr %s277, 4
        %s279 = scalar_lea.vmem %s3, %s278
        %v281 = vld [vmem:[%s274] sm:$0xf]
        %v282 = vld [vmem:[%s274 + $0x4] sm:$0xf]
        %v283 = vld [vmem:[%s274 + $0x8] sm:$0xf]
        %v284 = vld [vmem:[%s274 + $0xc] sm:$0xf]
        %v285 = vld [vmem:[%s274 + $0x10] sm:$0xf]
        %v286 = vld [vmem:[%s274 + $0x14] sm:$0xf]
        %v287 = vld [vmem:[%s274 + $0x18] sm:$0xf]
        %v288 = vld [vmem:[%s274 + $0x1c] sm:$0xf]
        %v289 = vld [vmem:[%s274 + $0x20] sm:$0xf]
        %v290 = vld [vmem:[%s274 + $0x24] sm:$0xf]
        %v291 = vld [vmem:[%s274 + $0x28] sm:$0xf]
        %v292 = vld [vmem:[%s274 + $0x2c] sm:$0xf]
        %v293 = vld [vmem:[%s274 + $0x30] sm:$0xf]
        %v294 = vld [vmem:[%s274 + $0x34] sm:$0xf]
        %v295 = vld [vmem:[%s274 + $0x38] sm:$0xf]
        %v296 = vld [vmem:[%s274 + $0x3c] sm:$0xf]
        %v297 = vld [vmem:[%s274 + $0x40] sm:$0xf]
        %v298 = vld [vmem:[%s274 + $0x44] sm:$0xf]
        %v299 = vld [vmem:[%s274 + $0x48] sm:$0xf]
        %v300 = vld [vmem:[%s274 + $0x4c] sm:$0xf]
        %v301 = vld [vmem:[%s274 + $0x50] sm:$0xf]
        %v302 = vld [vmem:[%s274 + $0x54] sm:$0xf]
        %v303 = vld [vmem:[%s274 + $0x58] sm:$0xf]
        %v304 = vld [vmem:[%s274 + $0x5c] sm:$0xf]
        %v305 = vld [vmem:[%s274 + $0x60] sm:$0xf]
        %v306 = vld [vmem:[%s274 + $0x64] sm:$0xf]
        %v307 = vld [vmem:[%s274 + $0x68] sm:$0xf]
        %v308 = vld [vmem:[%s274 + $0x6c] sm:$0xf]
        %v309 = vld [vmem:[%s274 + $0x70] sm:$0xf]
        %v310 = vld [vmem:[%s274 + $0x74] sm:$0xf]
        %v311 = vld [vmem:[%s274 + $0x78] sm:$0xf]
        %v312 = vld [vmem:[%s274 + $0x7c] sm:$0xf]
        %v313 = vld [vmem:[%s1] sm:$0xf]
        %v346 = vunpack.c.l.b16 %v281
        %v347 = vunpack.c.l.b16 %v282
        %v348 = vunpack.c.l.b16 %v283
        %v349 = vunpack.c.l.b16 %v284
        %v350 = vunpack.c.l.b16 %v285
        %v351 = vunpack.c.l.b16 %v286
        %v352 = vunpack.c.l.b16 %v287
        %v353 = vunpack.c.l.b16 %v288
        %v354 = vunpack.c.l.b16 %v289
        %v355 = vunpack.c.l.b16 %v290
        %v356 = vunpack.c.l.b16 %v291
        %v357 = vunpack.c.l.b16 %v292
        %v358 = vunpack.c.l.b16 %v293
        %v359 = vunpack.c.l.b16 %v294
        %v360 = vunpack.c.l.b16 %v295
        %v361 = vunpack.c.l.b16 %v296
        %v362 = vunpack.c.l.b16 %v297
        %v363 = vunpack.c.l.b16 %v298
        %v364 = vunpack.c.l.b16 %v299
        %v365 = vunpack.c.l.b16 %v300
        %v366 = vunpack.c.l.b16 %v301
        %v367 = vunpack.c.l.b16 %v302
        %v368 = vunpack.c.l.b16 %v303
        %v369 = vunpack.c.l.b16 %v304
        %v370 = vunpack.c.l.b16 %v305
        %v371 = vunpack.c.l.b16 %v306
        %v372 = vunpack.c.l.b16 %v307
        %v373 = vunpack.c.l.b16 %v308
        %v374 = vunpack.c.l.b16 %v309
        %v375 = vunpack.c.l.b16 %v310
        %v376 = vunpack.c.l.b16 %v311
        %v377 = vunpack.c.l.b16 %v312
        %v378 = vpack.c.b16 %v347, %v346
        %v379 = vpack.c.b16 %v349, %v348
        %v380 = vpack.c.b16 %v351, %v350
        %v381 = vpack.c.b16 %v353, %v352
        %v382 = vpack.c.b16 %v355, %v354
        %v383 = vpack.c.b16 %v357, %v356
        %v384 = vpack.c.b16 %v359, %v358
        %v385 = vpack.c.b16 %v361, %v360
        %v386 = vpack.c.b16 %v363, %v362
        %v387 = vpack.c.b16 %v365, %v364
        %v388 = vpack.c.b16 %v367, %v366
        %v389 = vpack.c.b16 %v369, %v368
        %v390 = vpack.c.b16 %v371, %v370
        %v391 = vpack.c.b16 %v373, %v372
        %v392 = vpack.c.b16 %v375, %v374
        %v393 = vpack.c.b16 %v377, %v376
        %vm394 = vcmask 64512
        %v396 = vsel %vm394, %v378, 0
        %v399 = vsel %vm394, %v379, 0
        %v402 = vsel %vm394, %v380, 0
        %v405 = vsel %vm394, %v381, 0
        %v408 = vsel %vm394, %v382, 0
        %v411 = vsel %vm394, %v383, 0
        %v414 = vsel %vm394, %v384, 0
        %v417 = vsel %vm394, %v385, 0
        %v420 = vsel %vm394, %v386, 0
        %v423 = vsel %vm394, %v387, 0
        %v426 = vsel %vm394, %v388, 0
        %v429 = vsel %vm394, %v389, 0
        %v432 = vsel %vm394, %v390, 0
        %v435 = vsel %vm394, %v391, 0
        %v438 = vsel %vm394, %v392, 0
        %v441 = vsel %vm394, %v393, 0
        %vm443 = vcmask 1043456
        %v445 = vsel %vm443, %v313, 0
        %447 = vmatprep.subr.bf16.mxu0 0
        %448 = vmatpush1.bf16.msra.mxu0 0
        %449 = vmatprep.subr.bf16.mxu0 0
        %450 = vmatpush1.bf16.msra.mxu0 0
        %451 = vmatprep.subr.bf16.mxu0 0
        %452 = vmatpush1.bf16.msra.mxu0 0
        %453 = vmatprep.subr.bf16.mxu0 0
        %454 = vmatpush1.bf16.msra.mxu0 0
        %455 = vmatprep.subr.bf16.mxu0 0
        %456 = vmatpush1.bf16.msra.mxu0 0
        %457 = vmatprep.subr.bf16.mxu0 0
        %458 = vmatpush1.bf16.msra.mxu0 0
        %459 = vmatprep.subr.bf16.mxu0 0
        %460 = vmatpush1.bf16.msra.mxu0 0
        %461 = vmatprep.subr.bf16.mxu0 0
        %462 = vmatpush1.bf16.msra.mxu0 %v445
        %463 = vmatprep.subr.bf16.mxu0 0
        %464 = vmatpush2.bf16.msra.mxu0 0
        %465 = vmatprep.subr.bf16.mxu0 0
        %466 = vmatpush2.bf16.msra.mxu0 0
        %467 = vmatprep.subr.bf16.mxu0 0
        %468 = vmatpush2.bf16.msra.mxu0 0
        %469 = vmatprep.subr.bf16.mxu0 0
        %470 = vmatpush2.bf16.msra.mxu0 0
        %471 = vmatprep.subr.bf16.mxu0 0
        %472 = vmatpush2.bf16.msra.mxu0 0
        %473 = vmatprep.subr.bf16.mxu0 0
        %474 = vmatpush2.bf16.msra.mxu0 0
        %475 = vmatprep.subr.bf16.mxu0 0
        %476 = vmatpush2.bf16.msra.mxu0 0
        %477 = vmatprep.subr.bf16.mxu0 0
        %478 = vmatpush2.bf16.msra.mxu0 0
        %479 = vmatprep.mubr.bf16.mxu0 0
        %480 = vmatmul.mubr.bf16.gmra.mxu0 %v396
        %v481 = vpop.f32.mrf.mxu0
        %v482 = vadd.f32 0.0, %v481
        %v483 = vpop.f32.mrf.mxu0
        %v484 = vpop.f32.mrf.mxu0
        %v485 = vadd.f32 0.0, %v484
        %v486 = vpop.f32.mrf.mxu0
        %487 = vmatprep.mubr.bf16.mxu0 0
        %488 = vmatmul.mubr.bf16.gmra.mxu0 %v399
        %v489 = vpop.f32.mrf.mxu0
        %v490 = vadd.f32 0.0, %v489
        %v491 = vpop.f32.mrf.mxu0
        %v492 = vpop.f32.mrf.mxu0
        %v493 = vadd.f32 0.0, %v492
        %v494 = vpop.f32.mrf.mxu0
        %495 = vmatprep.mubr.bf16.mxu0 0
        %496 = vmatmul.mubr.bf16.gmra.mxu0 %v402
        %v497 = vpop.f32.mrf.mxu0
        %v498 = vadd.f32 0.0, %v497
        %v499 = vpop.f32.mrf.mxu0
        %v500 = vpop.f32.mrf.mxu0
        %v501 = vadd.f32 0.0, %v500
        %v502 = vpop.f32.mrf.mxu0
        %503 = vmatprep.mubr.bf16.mxu0 0
        %504 = vmatmul.mubr.bf16.gmra.mxu0 %v405
        %v505 = vpop.f32.mrf.mxu0
        %v506 = vadd.f32 0.0, %v505
        %v507 = vpop.f32.mrf.mxu0
        %v508 = vpop.f32.mrf.mxu0
        %v509 = vadd.f32 0.0, %v508
        %v510 = vpop.f32.mrf.mxu0
        %511 = vmatprep.mubr.bf16.mxu0 0
        %512 = vmatmul.mubr.bf16.gmra.mxu0 %v408
        %v513 = vpop.f32.mrf.mxu0
        %v514 = vadd.f32 0.0, %v513
        %v515 = vpop.f32.mrf.mxu0
        %v516 = vpop.f32.mrf.mxu0
        %v517 = vadd.f32 0.0, %v516
        %v518 = vpop.f32.mrf.mxu0
        %519 = vmatprep.mubr.bf16.mxu0 0
        %520 = vmatmul.mubr.bf16.gmra.mxu0 %v411
        %v521 = vpop.f32.mrf.mxu0
        %v522 = vadd.f32 0.0, %v521
        %v523 = vpop.f32.mrf.mxu0
        %v524 = vpop.f32.mrf.mxu0
        %v525 = vadd.f32 0.0, %v524
        %v526 = vpop.f32.mrf.mxu0
        %527 = vmatprep.mubr.bf16.mxu0 0
        %528 = vmatmul.mubr.bf16.gmra.mxu0 %v414
        %v529 = vpop.f32.mrf.mxu0
        %v530 = vadd.f32 0.0, %v529
        %v531 = vpop.f32.mrf.mxu0
        %v532 = vpop.f32.mrf.mxu0
        %v533 = vadd.f32 0.0, %v532
        %v534 = vpop.f32.mrf.mxu0
        %535 = vmatprep.mubr.bf16.mxu0 0
        %536 = vmatmul.mubr.bf16.gmra.mxu0 %v417
        %v537 = vpop.f32.mrf.mxu0
        %v538 = vadd.f32 0.0, %v537
        %v539 = vpop.f32.mrf.mxu0
        %v540 = vpop.f32.mrf.mxu0
        %v541 = vadd.f32 0.0, %v540
        %v542 = vpop.f32.mrf.mxu0
        %543 = vmatprep.mubr.bf16.mxu0 0
        %544 = vmatmul.mubr.bf16.gmra.mxu0 %v420
        %v545 = vpop.f32.mrf.mxu0
        %v546 = vadd.f32 0.0, %v545
        %v547 = vpop.f32.mrf.mxu0
        %v548 = vpop.f32.mrf.mxu0
        %v549 = vadd.f32 0.0, %v548
        %v550 = vpop.f32.mrf.mxu0
        %551 = vmatprep.mubr.bf16.mxu0 0
        %552 = vmatmul.mubr.bf16.gmra.mxu0 %v423
        %v553 = vpop.f32.mrf.mxu0
        %v554 = vadd.f32 0.0, %v553
        %v555 = vpop.f32.mrf.mxu0
        %v556 = vpop.f32.mrf.mxu0
        %v557 = vadd.f32 0.0, %v556
        %v558 = vpop.f32.mrf.mxu0
        %559 = vmatprep.mubr.bf16.mxu0 0
        %560 = vmatmul.mubr.bf16.gmra.mxu0 %v426
        %v561 = vpop.f32.mrf.mxu0
        %v562 = vadd.f32 0.0, %v561
        %v563 = vpop.f32.mrf.mxu0
        %v564 = vpop.f32.mrf.mxu0
        %v565 = vadd.f32 0.0, %v564
        %v566 = vpop.f32.mrf.mxu0
        %567 = vmatprep.mubr.bf16.mxu0 0
        %568 = vmatmul.mubr.bf16.gmra.mxu0 %v429
        %v569 = vpop.f32.mrf.mxu0
        %v570 = vadd.f32 0.0, %v569
        %v571 = vpop.f32.mrf.mxu0
        %v572 = vpop.f32.mrf.mxu0
        %v573 = vadd.f32 0.0, %v572
        %v574 = vpop.f32.mrf.mxu0
        %575 = vmatprep.mubr.bf16.mxu0 0
        %576 = vmatmul.mubr.bf16.gmra.mxu0 %v432
        %v577 = vpop.f32.mrf.mxu0
        %v578 = vadd.f32 0.0, %v577
        %v579 = vpop.f32.mrf.mxu0
        %v580 = vpop.f32.mrf.mxu0
        %v581 = vadd.f32 0.0, %v580
        %v582 = vpop.f32.mrf.mxu0
        %583 = vmatprep.mubr.bf16.mxu0 0
        %584 = vmatmul.mubr.bf16.gmra.mxu0 %v435
        %v585 = vpop.f32.mrf.mxu0
        %v586 = vadd.f32 0.0, %v585
        %v587 = vpop.f32.mrf.mxu0
        %v588 = vpop.f32.mrf.mxu0
        %v589 = vadd.f32 0.0, %v588
        %v590 = vpop.f32.mrf.mxu0
        %591 = vmatprep.mubr.bf16.mxu0 0
        %592 = vmatmul.mubr.bf16.gmra.mxu0 %v438
        %v593 = vpop.f32.mrf.mxu0
        %v594 = vadd.f32 0.0, %v593
        %v595 = vpop.f32.mrf.mxu0
        %v596 = vpop.f32.mrf.mxu0
        %v597 = vadd.f32 0.0, %v596
        %v598 = vpop.f32.mrf.mxu0
        %599 = vmatprep.mubr.bf16.mxu0 0
        %600 = vmatmul.mubr.bf16.gmra.mxu0 %v441
        %v601 = vpop.f32.mrf.mxu0
        %v602 = vadd.f32 0.0, %v601
        %v603 = vpop.f32.mrf.mxu0
        %v604 = vpop.f32.mrf.mxu0
        %v605 = vadd.f32 0.0, %v604
        %v606 = vpop.f32.mrf.mxu0
        %607 = vdwg.mxu0
        %vm608 = vcmask 31744
        %v609 = vsel %vm608, %v482, 0.0
        %v610 = vsel %vm608, %v485, 0.0
        %v611 = vadd.f32 %v609, %v610
        %v612 = vsel %vm608, %v490, 0.0
        %v613 = vadd.f32 %v611, %v612
        %v614 = vsel %vm608, %v493, 0.0
        %v615 = vadd.f32 %v613, %v614
        %v616 = vsel %vm608, %v498, 0.0
        %v617 = vadd.f32 %v615, %v616
        %v618 = vsel %vm608, %v501, 0.0
        %v619 = vadd.f32 %v617, %v618
        %v620 = vsel %vm608, %v506, 0.0
        %v621 = vadd.f32 %v619, %v620
        %v622 = vsel %vm608, %v509, 0.0
        %v623 = vadd.f32 %v621, %v622
        %v624 = vsel %vm608, %v514, 0.0
        %v625 = vadd.f32 %v623, %v624
        %v626 = vsel %vm608, %v517, 0.0
        %v627 = vadd.f32 %v625, %v626
        %v628 = vsel %vm608, %v522, 0.0
        %v629 = vadd.f32 %v627, %v628
        %v630 = vsel %vm608, %v525, 0.0
        %v631 = vadd.f32 %v629, %v630
        %v632 = vsel %vm608, %v530, 0.0
        %v633 = vadd.f32 %v631, %v632
        %v634 = vsel %vm608, %v533, 0.0
        %v635 = vadd.f32 %v633, %v634
        %v636 = vsel %vm608, %v538, 0.0
        %v637 = vadd.f32 %v635, %v636
        %v638 = vsel %vm608, %v541, 0.0
        %v639 = vadd.f32 %v637, %v638
        %v640 = vsel %vm608, %v546, 0.0
        %v641 = vadd.f32 %v639, %v640
        %v642 = vsel %vm608, %v549, 0.0
        %v643 = vadd.f32 %v641, %v642
        %v644 = vsel %vm608, %v554, 0.0
        %v645 = vadd.f32 %v643, %v644
        %v646 = vsel %vm608, %v557, 0.0
        %v647 = vadd.f32 %v645, %v646
        %v648 = vsel %vm608, %v562, 0.0
        %v649 = vadd.f32 %v647, %v648
        %v650 = vsel %vm608, %v565, 0.0
        %v651 = vadd.f32 %v649, %v650
        %v652 = vsel %vm608, %v570, 0.0
        %v653 = vadd.f32 %v651, %v652
        %v654 = vsel %vm608, %v573, 0.0
        %v655 = vadd.f32 %v653, %v654
        %v656 = vsel %vm608, %v578, 0.0
        %v657 = vadd.f32 %v655, %v656
        %v658 = vsel %vm608, %v581, 0.0
        %v659 = vadd.f32 %v657, %v658
        %v660 = vsel %vm608, %v586, 0.0
        %v661 = vadd.f32 %v659, %v660
        %v662 = vsel %vm608, %v589, 0.0
        %v663 = vadd.f32 %v661, %v662
        %v664 = vsel %vm608, %v594, 0.0
        %v665 = vadd.f32 %v663, %v664
        %v666 = vsel %vm608, %v597, 0.0
        %v667 = vadd.f32 %v665, %v666
        %v668 = vsel %vm608, %v602, 0.0
        %v669 = vadd.f32 %v667, %v668
        %v670 = vsel %vm608, %v605, 0.0
        %v671 = vadd.f32 %v669, %v670
        %v672 = vrot.slane %v671, 4
        %v673 = vadd.f32 %v671, %v672
        %v674 = vrot.slane %v673, 2
        %v675 = vadd.f32 %v673, %v674
        %v676 = vrot.slane %v675, 1
        %v677 = vadd.f32 %v675, %v676
        %v678 = vmul.f32 %v677, 0.00390625
        %v679 = vsub.f32 %v482, %v678
        %v680 = vsub.f32 %v485, %v678
        %v681 = vsub.f32 %v490, %v678
        %v682 = vsub.f32 %v493, %v678
        %v683 = vsub.f32 %v498, %v678
        %v684 = vsub.f32 %v501, %v678
        %v685 = vsub.f32 %v506, %v678
        %v686 = vsub.f32 %v509, %v678
        %v687 = vsub.f32 %v514, %v678
        %v688 = vsub.f32 %v517, %v678
        %v689 = vsub.f32 %v522, %v678
        %v690 = vsub.f32 %v525, %v678
        %v691 = vsub.f32 %v530, %v678
        %v692 = vsub.f32 %v533, %v678
        %v693 = vsub.f32 %v538, %v678
        %v694 = vsub.f32 %v541, %v678
        %v695 = vsub.f32 %v546, %v678
        %v696 = vsub.f32 %v549, %v678
        %v697 = vsub.f32 %v554, %v678
        %v698 = vsub.f32 %v557, %v678
        %v699 = vsub.f32 %v562, %v678
        %v700 = vsub.f32 %v565, %v678
        %v701 = vsub.f32 %v570, %v678
        %v702 = vsub.f32 %v573, %v678
        %v703 = vsub.f32 %v578, %v678
        %v704 = vsub.f32 %v581, %v678
        %v705 = vsub.f32 %v586, %v678
        %v706 = vsub.f32 %v589, %v678
        %v707 = vsub.f32 %v594, %v678
        %v708 = vsub.f32 %v597, %v678
        %v709 = vsub.f32 %v602, %v678
        %v710 = vsub.f32 %v605, %v678
        %v711 = vmul.f32 %v679, %v679
        %v712 = vmul.f32 %v680, %v680
        %v713 = vmul.f32 %v681, %v681
        %v714 = vmul.f32 %v682, %v682
        %v715 = vmul.f32 %v683, %v683
        %v716 = vmul.f32 %v684, %v684
        %v717 = vmul.f32 %v685, %v685
        %v718 = vmul.f32 %v686, %v686
        %v719 = vmul.f32 %v687, %v687
        %v720 = vmul.f32 %v688, %v688
        %v721 = vmul.f32 %v689, %v689
        %v722 = vmul.f32 %v690, %v690
        %v723 = vmul.f32 %v691, %v691
        %v724 = vmul.f32 %v692, %v692
        %v725 = vmul.f32 %v693, %v693
        %v726 = vmul.f32 %v694, %v694
        %v727 = vmul.f32 %v695, %v695
        %v728 = vmul.f32 %v696, %v696
        %v729 = vmul.f32 %v697, %v697
        %v730 = vmul.f32 %v698, %v698
        %v731 = vmul.f32 %v699, %v699
        %v732 = vmul.f32 %v700, %v700
        %v733 = vmul.f32 %v701, %v701
        %v734 = vmul.f32 %v702, %v702
        %v735 = vmul.f32 %v703, %v703
        %v736 = vmul.f32 %v704, %v704
        %v737 = vmul.f32 %v705, %v705
        %v738 = vmul.f32 %v706, %v706
        %v739 = vmul.f32 %v707, %v707
        %v740 = vmul.f32 %v708, %v708
        %v741 = vmul.f32 %v709, %v709
        %v742 = vmul.f32 %v710, %v710
        %v743 = vsel %vm608, %v711, 0.0
        %v744 = vsel %vm608, %v712, 0.0
        %v745 = vadd.f32 %v743, %v744
        %v746 = vsel %vm608, %v713, 0.0
        %v747 = vadd.f32 %v745, %v746
        %v748 = vsel %vm608, %v714, 0.0
        %v749 = vadd.f32 %v747, %v748
        %v750 = vsel %vm608, %v715, 0.0
        %v751 = vadd.f32 %v749, %v750
        %v752 = vsel %vm608, %v716, 0.0
        %v753 = vadd.f32 %v751, %v752
        %v754 = vsel %vm608, %v717, 0.0
        %v755 = vadd.f32 %v753, %v754
        %v756 = vsel %vm608, %v718, 0.0
        %v757 = vadd.f32 %v755, %v756
        %v758 = vsel %vm608, %v719, 0.0
        %v759 = vadd.f32 %v757, %v758
        %v760 = vsel %vm608, %v720, 0.0
        %v761 = vadd.f32 %v759, %v760
        %v762 = vsel %vm608, %v721, 0.0
        %v763 = vadd.f32 %v761, %v762
        %v764 = vsel %vm608, %v722, 0.0
        %v765 = vadd.f32 %v763, %v764
        %v766 = vsel %vm608, %v723, 0.0
        %v767 = vadd.f32 %v765, %v766
        %v768 = vsel %vm608, %v724, 0.0
        %v769 = vadd.f32 %v767, %v768
        %v770 = vsel %vm608, %v725, 0.0
        %v771 = vadd.f32 %v769, %v770
        %v772 = vsel %vm608, %v726, 0.0
        %v773 = vadd.f32 %v771, %v772
        %v774 = vsel %vm608, %v727, 0.0
        %v775 = vadd.f32 %v773, %v774
        %v776 = vsel %vm608, %v728, 0.0
        %v777 = vadd.f32 %v775, %v776
        %v778 = vsel %vm608, %v729, 0.0
        %v779 = vadd.f32 %v777, %v778
        %v780 = vsel %vm608, %v730, 0.0
        %v781 = vadd.f32 %v779, %v780
        %v782 = vsel %vm608, %v731, 0.0
        %v783 = vadd.f32 %v781, %v782
        %v784 = vsel %vm608, %v732, 0.0
        %v785 = vadd.f32 %v783, %v784
        %v786 = vsel %vm608, %v733, 0.0
        %v787 = vadd.f32 %v785, %v786
        %v788 = vsel %vm608, %v734, 0.0
        %v789 = vadd.f32 %v787, %v788
        %v790 = vsel %vm608, %v735, 0.0
        %v791 = vadd.f32 %v789, %v790
        %v792 = vsel %vm608, %v736, 0.0
        %v793 = vadd.f32 %v791, %v792
        %v794 = vsel %vm608, %v737, 0.0
        %v795 = vadd.f32 %v793, %v794
        %v796 = vsel %vm608, %v738, 0.0
        %v797 = vadd.f32 %v795, %v796
        %v798 = vsel %vm608, %v739, 0.0
        %v799 = vadd.f32 %v797, %v798
        %v800 = vsel %vm608, %v740, 0.0
        %v801 = vadd.f32 %v799, %v800
        %v802 = vsel %vm608, %v741, 0.0
        %v803 = vadd.f32 %v801, %v802
        %v804 = vsel %vm608, %v742, 0.0
        %v805 = vadd.f32 %v803, %v804
        %v806 = vrot.slane %v805, 4
        %v807 = vadd.f32 %v805, %v806
        %v808 = vrot.slane %v807, 2
        %v809 = vadd.f32 %v807, %v808
        %v810 = vrot.slane %v809, 1
        %v811 = vadd.f32 %v809, %v810
        %vm812 = vcmask 24576
        %813 = vst.msk [vmem:[%s255] sm:$0x1] %vm812, %v678
        %814 = vst.msk [vmem:[%s255 + $0x1] sm:$0x1] %vm812, %v811
        %v815 = vpack.c.bf16 %v485, %v482
        %v816 = vpack.c.bf16 %v493, %v490
        %v817 = vpack.c.bf16 %v501, %v498
        %v818 = vpack.c.bf16 %v509, %v506
        %v819 = vpack.c.bf16 %v517, %v514
        %v820 = vpack.c.bf16 %v525, %v522
        %v821 = vpack.c.bf16 %v533, %v530
        %v822 = vpack.c.bf16 %v541, %v538
        %v823 = vpack.c.bf16 %v549, %v546
        %v824 = vpack.c.bf16 %v557, %v554
        %v825 = vpack.c.bf16 %v565, %v562
        %v826 = vpack.c.bf16 %v573, %v570
        %v827 = vpack.c.bf16 %v581, %v578
        %v828 = vpack.c.bf16 %v589, %v586
        %v829 = vpack.c.bf16 %v597, %v594
        %v830 = vpack.c.bf16 %v605, %v602
        %v847 = vunpack.c.l.b16 %v815
        %v848 = vunpack.c.h.b16 %v815
        %v849 = vunpack.c.l.b16 %v816
        %v850 = vunpack.c.h.b16 %v816
        %v851 = vunpack.c.l.b16 %v817
        %v852 = vunpack.c.h.b16 %v817
        %v853 = vunpack.c.l.b16 %v818
        %v854 = vunpack.c.h.b16 %v818
        %v855 = vunpack.c.l.b16 %v819
        %v856 = vunpack.c.h.b16 %v819
        %v857 = vunpack.c.l.b16 %v820
        %v858 = vunpack.c.h.b16 %v820
        %v859 = vunpack.c.l.b16 %v821
        %v860 = vunpack.c.h.b16 %v821
        %v861 = vunpack.c.l.b16 %v822
        %v862 = vunpack.c.h.b16 %v822
        %v863 = vunpack.c.l.b16 %v823
        %v864 = vunpack.c.h.b16 %v823
        %v865 = vunpack.c.l.b16 %v824
        %v866 = vunpack.c.h.b16 %v824
        %v867 = vunpack.c.l.b16 %v825
        %v868 = vunpack.c.h.b16 %v825
        %v869 = vunpack.c.l.b16 %v826
        %v870 = vunpack.c.h.b16 %v826
        %v871 = vunpack.c.l.b16 %v827
        %v872 = vunpack.c.h.b16 %v827
        %v873 = vunpack.c.l.b16 %v828
        %v874 = vunpack.c.h.b16 %v828
        %v875 = vunpack.c.l.b16 %v829
        %v876 = vunpack.c.h.b16 %v829
        %v877 = vunpack.c.l.b16 %v830
        %v878 = vunpack.c.h.b16 %v830
        %v879 = vpack.c.b16 %v847, %v847
        %v880 = vpack.c.b16 %v848, %v848
        %v881 = vpack.c.b16 %v849, %v849
        %v882 = vpack.c.b16 %v850, %v850
        %v883 = vpack.c.b16 %v851, %v851
        %v884 = vpack.c.b16 %v852, %v852
        %v885 = vpack.c.b16 %v853, %v853
        %v886 = vpack.c.b16 %v854, %v854
        %v887 = vpack.c.b16 %v855, %v855
        %v888 = vpack.c.b16 %v856, %v856
        %v889 = vpack.c.b16 %v857, %v857
        %v890 = vpack.c.b16 %v858, %v858
        %v891 = vpack.c.b16 %v859, %v859
        %v892 = vpack.c.b16 %v860, %v860
        %v893 = vpack.c.b16 %v861, %v861
        %v894 = vpack.c.b16 %v862, %v862
        %v895 = vpack.c.b16 %v863, %v863
        %v896 = vpack.c.b16 %v864, %v864
        %v897 = vpack.c.b16 %v865, %v865
        %v898 = vpack.c.b16 %v866, %v866
        %v899 = vpack.c.b16 %v867, %v867
        %v900 = vpack.c.b16 %v868, %v868
        %v901 = vpack.c.b16 %v869, %v869
        %v902 = vpack.c.b16 %v870, %v870
        %v903 = vpack.c.b16 %v871, %v871
        %v904 = vpack.c.b16 %v872, %v872
        %v905 = vpack.c.b16 %v873, %v873
        %v906 = vpack.c.b16 %v874, %v874
        %v907 = vpack.c.b16 %v875, %v875
        %v908 = vpack.c.b16 %v876, %v876
        %v909 = vpack.c.b16 %v877, %v877
        %v910 = vpack.c.b16 %v878, %v878
        %vm943 = vcmask 27648
        %944 = vst.msk [vmem:[%s279] sm:$0xf] %vm943, %v879
        %945 = vst.msk [vmem:[%s279 + $0x4] sm:$0xf] %vm943, %v880
        %946 = vst.msk [vmem:[%s279 + $0x8] sm:$0xf] %vm943, %v881
        %947 = vst.msk [vmem:[%s279 + $0xc] sm:$0xf] %vm943, %v882
        %948 = vst.msk [vmem:[%s279 + $0x10] sm:$0xf] %vm943, %v883
        %949 = vst.msk [vmem:[%s279 + $0x14] sm:$0xf] %vm943, %v884
        %950 = vst.msk [vmem:[%s279 + $0x18] sm:$0xf] %vm943, %v885
        %951 = vst.msk [vmem:[%s279 + $0x1c] sm:$0xf] %vm943, %v886
        %952 = vst.msk [vmem:[%s279 + $0x20] sm:$0xf] %vm943, %v887
        %953 = vst.msk [vmem:[%s279 + $0x24] sm:$0xf] %vm943, %v888
        %954 = vst.msk [vmem:[%s279 + $0x28] sm:$0xf] %vm943, %v889
        %955 = vst.msk [vmem:[%s279 + $0x2c] sm:$0xf] %vm943, %v890
        %956 = vst.msk [vmem:[%s279 + $0x30] sm:$0xf] %vm943, %v891
        %957 = vst.msk [vmem:[%s279 + $0x34] sm:$0xf] %vm943, %v892
        %958 = vst.msk [vmem:[%s279 + $0x38] sm:$0xf] %vm943, %v893
        %959 = vst.msk [vmem:[%s279 + $0x3c] sm:$0xf] %vm943, %v894
        %960 = vst.msk [vmem:[%s279 + $0x40] sm:$0xf] %vm943, %v895
        %961 = vst.msk [vmem:[%s279 + $0x44] sm:$0xf] %vm943, %v896
        %962 = vst.msk [vmem:[%s279 + $0x48] sm:$0xf] %vm943, %v897
        %963 = vst.msk [vmem:[%s279 + $0x4c] sm:$0xf] %vm943, %v898
        %964 = vst.msk [vmem:[%s279 + $0x50] sm:$0xf] %vm943, %v899
        %965 = vst.msk [vmem:[%s279 + $0x54] sm:$0xf] %vm943, %v900
        %966 = vst.msk [vmem:[%s279 + $0x58] sm:$0xf] %vm943, %v901
        %967 = vst.msk [vmem:[%s279 + $0x5c] sm:$0xf] %vm943, %v902
        %968 = vst.msk [vmem:[%s279 + $0x60] sm:$0xf] %vm943, %v903
        %969 = vst.msk [vmem:[%s279 + $0x64] sm:$0xf] %vm943, %v904
        %970 = vst.msk [vmem:[%s279 + $0x68] sm:$0xf] %vm943, %v905
        %971 = vst.msk [vmem:[%s279 + $0x6c] sm:$0xf] %vm943, %v906
        %972 = vst.msk [vmem:[%s279 + $0x70] sm:$0xf] %vm943, %v907
        %973 = vst.msk [vmem:[%s279 + $0x74] sm:$0xf] %vm943, %v908
        %974 = vst.msk [vmem:[%s279 + $0x78] sm:$0xf] %vm943, %v909
        %975 = vst.msk [vmem:[%s279 + $0x7c] sm:$0xf] %vm943, %v910
        %v976 = vld [vmem:[%s2] sm:$0xf]
        %v978 = vsel %vm443, %v976, 0
        %980 = vmatprep.subr.bf16.mxu0 0
        %981 = vmatpush1.bf16.msra.mxu0 0
        %982 = vmatprep.subr.bf16.mxu0 0
        %983 = vmatpush1.bf16.msra.mxu0 0
        %984 = vmatprep.subr.bf16.mxu0 0
        %985 = vmatpush1.bf16.msra.mxu0 0
        %986 = vmatprep.subr.bf16.mxu0 0
        %987 = vmatpush1.bf16.msra.mxu0 0
        %988 = vmatprep.subr.bf16.mxu0 0
        %989 = vmatpush1.bf16.msra.mxu0 0
        %990 = vmatprep.subr.bf16.mxu0 0
        %991 = vmatpush1.bf16.msra.mxu0 0
        %992 = vmatprep.subr.bf16.mxu0 0
        %993 = vmatpush1.bf16.msra.mxu0 0
        %994 = vmatprep.subr.bf16.mxu0 0
        %995 = vmatpush1.bf16.msra.mxu0 %v978
        %996 = vmatprep.subr.bf16.mxu0 0
        %997 = vmatpush2.bf16.msra.mxu0 0
        %998 = vmatprep.subr.bf16.mxu0 0
        %999 = vmatpush2.bf16.msra.mxu0 0
        %1000 = vmatprep.subr.bf16.mxu0 0
        %1001 = vmatpush2.bf16.msra.mxu0 0
        %1002 = vmatprep.subr.bf16.mxu0 0
        %1003 = vmatpush2.bf16.msra.mxu0 0
        %1004 = vmatprep.subr.bf16.mxu0 0
        %1005 = vmatpush2.bf16.msra.mxu0 0
        %1006 = vmatprep.subr.bf16.mxu0 0
        %1007 = vmatpush2.bf16.msra.mxu0 0
        %1008 = vmatprep.subr.bf16.mxu0 0
        %1009 = vmatpush2.bf16.msra.mxu0 0
        %1010 = vmatprep.subr.bf16.mxu0 0
        %1011 = vmatpush2.bf16.msra.mxu0 0
        %1012 = vmatprep.mubr.bf16.mxu0 0
        %1013 = vmatmul.mubr.bf16.gmra.mxu0 %v396
        %v1014 = vpop.f32.mrf.mxu0
        %v1015 = vadd.f32 0.0, %v1014
        %v1016 = vpop.f32.mrf.mxu0
        %v1017 = vpop.f32.mrf.mxu0
        %v1018 = vadd.f32 0.0, %v1017
        %v1019 = vpop.f32.mrf.mxu0
        %1020 = vmatprep.mubr.bf16.mxu0 0
        %1021 = vmatmul.mubr.bf16.gmra.mxu0 %v399
        %v1022 = vpop.f32.mrf.mxu0
        %v1023 = vadd.f32 0.0, %v1022
        %v1024 = vpop.f32.mrf.mxu0
        %v1025 = vpop.f32.mrf.mxu0
        %v1026 = vadd.f32 0.0, %v1025
        %v1027 = vpop.f32.mrf.mxu0
        %1028 = vmatprep.mubr.bf16.mxu0 0
        %1029 = vmatmul.mubr.bf16.gmra.mxu0 %v402
        %v1030 = vpop.f32.mrf.mxu0
        %v1031 = vadd.f32 0.0, %v1030
        %v1032 = vpop.f32.mrf.mxu0
        %v1033 = vpop.f32.mrf.mxu0
        %v1034 = vadd.f32 0.0, %v1033
        %v1035 = vpop.f32.mrf.mxu0
        %1036 = vmatprep.mubr.bf16.mxu0 0
        %1037 = vmatmul.mubr.bf16.gmra.mxu0 %v405
        %v1038 = vpop.f32.mrf.mxu0
        %v1039 = vadd.f32 0.0, %v1038
        %v1040 = vpop.f32.mrf.mxu0
        %v1041 = vpop.f32.mrf.mxu0
        %v1042 = vadd.f32 0.0, %v1041
        %v1043 = vpop.f32.mrf.mxu0
        %1044 = vmatprep.mubr.bf16.mxu0 0
        %1045 = vmatmul.mubr.bf16.gmra.mxu0 %v408
        %v1046 = vpop.f32.mrf.mxu0
        %v1047 = vadd.f32 0.0, %v1046
        %v1048 = vpop.f32.mrf.mxu0
        %v1049 = vpop.f32.mrf.mxu0
        %v1050 = vadd.f32 0.0, %v1049
        %v1051 = vpop.f32.mrf.mxu0
        %1052 = vmatprep.mubr.bf16.mxu0 0
        %1053 = vmatmul.mubr.bf16.gmra.mxu0 %v411
        %v1054 = vpop.f32.mrf.mxu0
        %v1055 = vadd.f32 0.0, %v1054
        %v1056 = vpop.f32.mrf.mxu0
        %v1057 = vpop.f32.mrf.mxu0
        %v1058 = vadd.f32 0.0, %v1057
        %v1059 = vpop.f32.mrf.mxu0
        %1060 = vmatprep.mubr.bf16.mxu0 0
        %1061 = vmatmul.mubr.bf16.gmra.mxu0 %v414
        %v1062 = vpop.f32.mrf.mxu0
        %v1063 = vadd.f32 0.0, %v1062
        %v1064 = vpop.f32.mrf.mxu0
        %v1065 = vpop.f32.mrf.mxu0
        %v1066 = vadd.f32 0.0, %v1065
        %v1067 = vpop.f32.mrf.mxu0
        %1068 = vmatprep.mubr.bf16.mxu0 0
        %1069 = vmatmul.mubr.bf16.gmra.mxu0 %v417
        %v1070 = vpop.f32.mrf.mxu0
        %v1071 = vadd.f32 0.0, %v1070
        %v1072 = vpop.f32.mrf.mxu0
        %v1073 = vpop.f32.mrf.mxu0
        %v1074 = vadd.f32 0.0, %v1073
        %v1075 = vpop.f32.mrf.mxu0
        %1076 = vmatprep.mubr.bf16.mxu0 0
        %1077 = vmatmul.mubr.bf16.gmra.mxu0 %v420
        %v1078 = vpop.f32.mrf.mxu0
        %v1079 = vadd.f32 0.0, %v1078
        %v1080 = vpop.f32.mrf.mxu0
        %v1081 = vpop.f32.mrf.mxu0
        %v1082 = vadd.f32 0.0, %v1081
        %v1083 = vpop.f32.mrf.mxu0
        %1084 = vmatprep.mubr.bf16.mxu0 0
        %1085 = vmatmul.mubr.bf16.gmra.mxu0 %v423
        %v1086 = vpop.f32.mrf.mxu0
        %v1087 = vadd.f32 0.0, %v1086
        %v1088 = vpop.f32.mrf.mxu0
        %v1089 = vpop.f32.mrf.mxu0
        %v1090 = vadd.f32 0.0, %v1089
        %v1091 = vpop.f32.mrf.mxu0
        %1092 = vmatprep.mubr.bf16.mxu0 0
        %1093 = vmatmul.mubr.bf16.gmra.mxu0 %v426
        %v1094 = vpop.f32.mrf.mxu0
        %v1095 = vadd.f32 0.0, %v1094
        %v1096 = vpop.f32.mrf.mxu0
        %v1097 = vpop.f32.mrf.mxu0
        %v1098 = vadd.f32 0.0, %v1097
        %v1099 = vpop.f32.mrf.mxu0
        %1100 = vmatprep.mubr.bf16.mxu0 0
        %1101 = vmatmul.mubr.bf16.gmra.mxu0 %v429
        %v1102 = vpop.f32.mrf.mxu0
        %v1103 = vadd.f32 0.0, %v1102
        %v1104 = vpop.f32.mrf.mxu0
        %v1105 = vpop.f32.mrf.mxu0
        %v1106 = vadd.f32 0.0, %v1105
        %v1107 = vpop.f32.mrf.mxu0
        %1108 = vmatprep.mubr.bf16.mxu0 0
        %1109 = vmatmul.mubr.bf16.gmra.mxu0 %v432
        %v1110 = vpop.f32.mrf.mxu0
        %v1111 = vadd.f32 0.0, %v1110
        %v1112 = vpop.f32.mrf.mxu0
        %v1113 = vpop.f32.mrf.mxu0
        %v1114 = vadd.f32 0.0, %v1113
        %v1115 = vpop.f32.mrf.mxu0
        %1116 = vmatprep.mubr.bf16.mxu0 0
        %1117 = vmatmul.mubr.bf16.gmra.mxu0 %v435
        %v1118 = vpop.f32.mrf.mxu0
        %v1119 = vadd.f32 0.0, %v1118
        %v1120 = vpop.f32.mrf.mxu0
        %v1121 = vpop.f32.mrf.mxu0
        %v1122 = vadd.f32 0.0, %v1121
        %v1123 = vpop.f32.mrf.mxu0
        %1124 = vmatprep.mubr.bf16.mxu0 0
        %1125 = vmatmul.mubr.bf16.gmra.mxu0 %v438
        %v1126 = vpop.f32.mrf.mxu0
        %v1127 = vadd.f32 0.0, %v1126
        %v1128 = vpop.f32.mrf.mxu0
        %v1129 = vpop.f32.mrf.mxu0
        %v1130 = vadd.f32 0.0, %v1129
        %v1131 = vpop.f32.mrf.mxu0
        %1132 = vmatprep.mubr.bf16.mxu0 0
        %1133 = vmatmul.mubr.bf16.gmra.mxu0 %v441
        %v1134 = vpop.f32.mrf.mxu0
        %v1135 = vadd.f32 0.0, %v1134
        %v1136 = vpop.f32.mrf.mxu0
        %v1137 = vpop.f32.mrf.mxu0
        %v1138 = vadd.f32 0.0, %v1137
        %v1139 = vpop.f32.mrf.mxu0
        %1140 = vdwg.mxu0
        %vm1141 = vcmask 130048
        %v1142 = vsel %vm1141, %v1015, 0.0
        %v1143 = vsel %vm1141, %v1018, 0.0
        %v1144 = vadd.f32 %v1142, %v1143
        %v1145 = vsel %vm1141, %v1023, 0.0
        %v1146 = vadd.f32 %v1144, %v1145
        %v1147 = vsel %vm1141, %v1026, 0.0
        %v1148 = vadd.f32 %v1146, %v1147
        %v1149 = vsel %vm1141, %v1031, 0.0
        %v1150 = vadd.f32 %v1148, %v1149
        %v1151 = vsel %vm1141, %v1034, 0.0
        %v1152 = vadd.f32 %v1150, %v1151
        %v1153 = vsel %vm1141, %v1039, 0.0
        %v1154 = vadd.f32 %v1152, %v1153
        %v1155 = vsel %vm1141, %v1042, 0.0
        %v1156 = vadd.f32 %v1154, %v1155
        %v1157 = vsel %vm1141, %v1047, 0.0
        %v1158 = vadd.f32 %v1156, %v1157
        %v1159 = vsel %vm1141, %v1050, 0.0
        %v1160 = vadd.f32 %v1158, %v1159
        %v1161 = vsel %vm1141, %v1055, 0.0
        %v1162 = vadd.f32 %v1160, %v1161
        %v1163 = vsel %vm1141, %v1058, 0.0
        %v1164 = vadd.f32 %v1162, %v1163
        %v1165 = vsel %vm1141, %v1063, 0.0
        %v1166 = vadd.f32 %v1164, %v1165
        %v1167 = vsel %vm1141, %v1066, 0.0
        %v1168 = vadd.f32 %v1166, %v1167
        %v1169 = vsel %vm1141, %v1071, 0.0
        %v1170 = vadd.f32 %v1168, %v1169
        %v1171 = vsel %vm1141, %v1074, 0.0
        %v1172 = vadd.f32 %v1170, %v1171
        %v1173 = vsel %vm1141, %v1079, 0.0
        %v1174 = vadd.f32 %v1172, %v1173
        %v1175 = vsel %vm1141, %v1082, 0.0
        %v1176 = vadd.f32 %v1174, %v1175
        %v1177 = vsel %vm1141, %v1087, 0.0
        %v1178 = vadd.f32 %v1176, %v1177
        %v1179 = vsel %vm1141, %v1090, 0.0
        %v1180 = vadd.f32 %v1178, %v1179
        %v1181 = vsel %vm1141, %v1095, 0.0
        %v1182 = vadd.f32 %v1180, %v1181
        %v1183 = vsel %vm1141, %v1098, 0.0
        %v1184 = vadd.f32 %v1182, %v1183
        %v1185 = vsel %vm1141, %v1103, 0.0
        %v1186 = vadd.f32 %v1184, %v1185
        %v1187 = vsel %vm1141, %v1106, 0.0
        %v1188 = vadd.f32 %v1186, %v1187
        %v1189 = vsel %vm1141, %v1111, 0.0
        %v1190 = vadd.f32 %v1188, %v1189
        %v1191 = vsel %vm1141, %v1114, 0.0
        %v1192 = vadd.f32 %v1190, %v1191
        %v1193 = vsel %vm1141, %v1119, 0.0
        %v1194 = vadd.f32 %v1192, %v1193
        %v1195 = vsel %vm1141, %v1122, 0.0
        %v1196 = vadd.f32 %v1194, %v1195
        %v1197 = vsel %vm1141, %v1127, 0.0
        %v1198 = vadd.f32 %v1196, %v1197
        %v1199 = vsel %vm1141, %v1130, 0.0
        %v1200 = vadd.f32 %v1198, %v1199
        %v1201 = vsel %vm1141, %v1135, 0.0
        %v1202 = vadd.f32 %v1200, %v1201
        %v1203 = vsel %vm1141, %v1138, 0.0
        %v1204 = vadd.f32 %v1202, %v1203
        %v1205 = vrot.slane %v1204, 4
        %v1206 = vadd.f32 %v1204, %v1205
        %v1207 = vrot.slane %v1206, 2
        %v1208 = vadd.f32 %v1206, %v1207
        %v1209 = vrot.slane %v1208, 1
        %v1210 = vadd.f32 %v1208, %v1209
        %v1211 = vmul.f32 %v1210, 0.00390625
        %v1212 = vsub.f32 %v1015, %v1211
        %v1213 = vsub.f32 %v1018, %v1211
        %v1214 = vsub.f32 %v1023, %v1211
        %v1215 = vsub.f32 %v1026, %v1211
        %v1216 = vsub.f32 %v1031, %v1211
        %v1217 = vsub.f32 %v1034, %v1211
        %v1218 = vsub.f32 %v1039, %v1211
        %v1219 = vsub.f32 %v1042, %v1211
        %v1220 = vsub.f32 %v1047, %v1211
        %v1221 = vsub.f32 %v1050, %v1211
        %v1222 = vsub.f32 %v1055, %v1211
        %v1223 = vsub.f32 %v1058, %v1211
        %v1224 = vsub.f32 %v1063, %v1211
        %v1225 = vsub.f32 %v1066, %v1211
        %v1226 = vsub.f32 %v1071, %v1211
        %v1227 = vsub.f32 %v1074, %v1211
        %v1228 = vsub.f32 %v1079, %v1211
        %v1229 = vsub.f32 %v1082, %v1211
        %v1230 = vsub.f32 %v1087, %v1211
        %v1231 = vsub.f32 %v1090, %v1211
        %v1232 = vsub.f32 %v1095, %v1211
        %v1233 = vsub.f32 %v1098, %v1211
        %v1234 = vsub.f32 %v1103, %v1211
        %v1235 = vsub.f32 %v1106, %v1211
        %v1236 = vsub.f32 %v1111, %v1211
        %v1237 = vsub.f32 %v1114, %v1211
        %v1238 = vsub.f32 %v1119, %v1211
        %v1239 = vsub.f32 %v1122, %v1211
        %v1240 = vsub.f32 %v1127, %v1211
        %v1241 = vsub.f32 %v1130, %v1211
        %v1242 = vsub.f32 %v1135, %v1211
        %v1243 = vsub.f32 %v1138, %v1211
        %v1244 = vmul.f32 %v1212, %v1212
        %v1245 = vmul.f32 %v1213, %v1213
        %v1246 = vmul.f32 %v1214, %v1214
        %v1247 = vmul.f32 %v1215, %v1215
        %v1248 = vmul.f32 %v1216, %v1216
        %v1249 = vmul.f32 %v1217, %v1217
        %v1250 = vmul.f32 %v1218, %v1218
        %v1251 = vmul.f32 %v1219, %v1219
        %v1252 = vmul.f32 %v1220, %v1220
        %v1253 = vmul.f32 %v1221, %v1221
        %v1254 = vmul.f32 %v1222, %v1222
        %v1255 = vmul.f32 %v1223, %v1223
        %v1256 = vmul.f32 %v1224, %v1224
        %v1257 = vmul.f32 %v1225, %v1225
        %v1258 = vmul.f32 %v1226, %v1226
        %v1259 = vmul.f32 %v1227, %v1227
        %v1260 = vmul.f32 %v1228, %v1228
        %v1261 = vmul.f32 %v1229, %v1229
        %v1262 = vmul.f32 %v1230, %v1230
        %v1263 = vmul.f32 %v1231, %v1231
        %v1264 = vmul.f32 %v1232, %v1232
        %v1265 = vmul.f32 %v1233, %v1233
        %v1266 = vmul.f32 %v1234, %v1234
        %v1267 = vmul.f32 %v1235, %v1235
        %v1268 = vmul.f32 %v1236, %v1236
        %v1269 = vmul.f32 %v1237, %v1237
        %v1270 = vmul.f32 %v1238, %v1238
        %v1271 = vmul.f32 %v1239, %v1239
        %v1272 = vmul.f32 %v1240, %v1240
        %v1273 = vmul.f32 %v1241, %v1241
        %v1274 = vmul.f32 %v1242, %v1242
        %v1275 = vmul.f32 %v1243, %v1243
        %v1276 = vsel %vm1141, %v1244, 0.0
        %v1277 = vsel %vm1141, %v1245, 0.0
        %v1278 = vadd.f32 %v1276, %v1277
        %v1279 = vsel %vm1141, %v1246, 0.0
        %v1280 = vadd.f32 %v1278, %v1279
        %v1281 = vsel %vm1141, %v1247, 0.0
        %v1282 = vadd.f32 %v1280, %v1281
        %v1283 = vsel %vm1141, %v1248, 0.0
        %v1284 = vadd.f32 %v1282, %v1283
        %v1285 = vsel %vm1141, %v1249, 0.0
        %v1286 = vadd.f32 %v1284, %v1285
        %v1287 = vsel %vm1141, %v1250, 0.0
        %v1288 = vadd.f32 %v1286, %v1287
        %v1289 = vsel %vm1141, %v1251, 0.0
        %v1290 = vadd.f32 %v1288, %v1289
        %v1291 = vsel %vm1141, %v1252, 0.0
        %v1292 = vadd.f32 %v1290, %v1291
        %v1293 = vsel %vm1141, %v1253, 0.0
        %v1294 = vadd.f32 %v1292, %v1293
        %v1295 = vsel %vm1141, %v1254, 0.0
        %v1296 = vadd.f32 %v1294, %v1295
        %v1297 = vsel %vm1141, %v1255, 0.0
        %v1298 = vadd.f32 %v1296, %v1297
        %v1299 = vsel %vm1141, %v1256, 0.0
        %v1300 = vadd.f32 %v1298, %v1299
        %v1301 = vsel %vm1141, %v1257, 0.0
        %v1302 = vadd.f32 %v1300, %v1301
        %v1303 = vsel %vm1141, %v1258, 0.0
        %v1304 = vadd.f32 %v1302, %v1303
        %v1305 = vsel %vm1141, %v1259, 0.0
        %v1306 = vadd.f32 %v1304, %v1305
        %v1307 = vsel %vm1141, %v1260, 0.0
        %v1308 = vadd.f32 %v1306, %v1307
        %v1309 = vsel %vm1141, %v1261, 0.0
        %v1310 = vadd.f32 %v1308, %v1309
        %v1311 = vsel %vm1141, %v1262, 0.0
        %v1312 = vadd.f32 %v1310, %v1311
        %v1313 = vsel %vm1141, %v1263, 0.0
        %v1314 = vadd.f32 %v1312, %v1313
        %v1315 = vsel %vm1141, %v1264, 0.0
        %v1316 = vadd.f32 %v1314, %v1315
        %v1317 = vsel %vm1141, %v1265, 0.0
        %v1318 = vadd.f32 %v1316, %v1317
        %v1319 = vsel %vm1141, %v1266, 0.0
        %v1320 = vadd.f32 %v1318, %v1319
        %v1321 = vsel %vm1141, %v1267, 0.0
        %v1322 = vadd.f32 %v1320, %v1321
        %v1323 = vsel %vm1141, %v1268, 0.0
        %v1324 = vadd.f32 %v1322, %v1323
        %v1325 = vsel %vm1141, %v1269, 0.0
        %v1326 = vadd.f32 %v1324, %v1325
        %v1327 = vsel %vm1141, %v1270, 0.0
        %v1328 = vadd.f32 %v1326, %v1327
        %v1329 = vsel %vm1141, %v1271, 0.0
        %v1330 = vadd.f32 %v1328, %v1329
        %v1331 = vsel %vm1141, %v1272, 0.0
        %v1332 = vadd.f32 %v1330, %v1331
        %v1333 = vsel %vm1141, %v1273, 0.0
        %v1334 = vadd.f32 %v1332, %v1333
        %v1335 = vsel %vm1141, %v1274, 0.0
        %v1336 = vadd.f32 %v1334, %v1335
        %v1337 = vsel %vm1141, %v1275, 0.0
        %v1338 = vadd.f32 %v1336, %v1337
        %v1339 = vrot.slane %v1338, 4
        %v1340 = vadd.f32 %v1338, %v1339
        %v1341 = vrot.slane %v1340, 2
        %v1342 = vadd.f32 %v1340, %v1341
        %v1343 = vrot.slane %v1342, 1
        %v1344 = vadd.f32 %v1342, %v1343
        %vm1345 = vcmask 122880
        %1346 = vst.msk [vmem:[%s269] sm:$0x1] %vm1345, %v1211
        %1347 = vst.msk [vmem:[%s269 + $0x1] sm:$0x1] %vm1345, %v1344
        %v1348 = vpack.c.bf16 %v1018, %v1015
        %v1349 = vpack.c.bf16 %v1026, %v1023
        %v1350 = vpack.c.bf16 %v1034, %v1031
        %v1351 = vpack.c.bf16 %v1042, %v1039
        %v1352 = vpack.c.bf16 %v1050, %v1047
        %v1353 = vpack.c.bf16 %v1058, %v1055
        %v1354 = vpack.c.bf16 %v1066, %v1063
        %v1355 = vpack.c.bf16 %v1074, %v1071
        %v1356 = vpack.c.bf16 %v1082, %v1079
        %v1357 = vpack.c.bf16 %v1090, %v1087
        %v1358 = vpack.c.bf16 %v1098, %v1095
        %v1359 = vpack.c.bf16 %v1106, %v1103
        %v1360 = vpack.c.bf16 %v1114, %v1111
        %v1361 = vpack.c.bf16 %v1122, %v1119
        %v1362 = vpack.c.bf16 %v1130, %v1127
        %v1363 = vpack.c.bf16 %v1138, %v1135
        %v1380 = vunpack.c.l.b16 %v1348
        %v1381 = vunpack.c.h.b16 %v1348
        %v1382 = vunpack.c.l.b16 %v1349
        %v1383 = vunpack.c.h.b16 %v1349
        %v1384 = vunpack.c.l.b16 %v1350
        %v1385 = vunpack.c.h.b16 %v1350
        %v1386 = vunpack.c.l.b16 %v1351
        %v1387 = vunpack.c.h.b16 %v1351
        %v1388 = vunpack.c.l.b16 %v1352
        %v1389 = vunpack.c.h.b16 %v1352
        %v1390 = vunpack.c.l.b16 %v1353
        %v1391 = vunpack.c.h.b16 %v1353
        %v1392 = vunpack.c.l.b16 %v1354
        %v1393 = vunpack.c.h.b16 %v1354
        %v1394 = vunpack.c.l.b16 %v1355
        %v1395 = vunpack.c.h.b16 %v1355
        %v1396 = vunpack.c.l.b16 %v1356
        %v1397 = vunpack.c.h.b16 %v1356
        %v1398 = vunpack.c.l.b16 %v1357
        %v1399 = vunpack.c.h.b16 %v1357
        %v1400 = vunpack.c.l.b16 %v1358
        %v1401 = vunpack.c.h.b16 %v1358
        %v1402 = vunpack.c.l.b16 %v1359
        %v1403 = vunpack.c.h.b16 %v1359
        %v1404 = vunpack.c.l.b16 %v1360
        %v1405 = vunpack.c.h.b16 %v1360
        %v1406 = vunpack.c.l.b16 %v1361
        %v1407 = vunpack.c.h.b16 %v1361
        %v1408 = vunpack.c.l.b16 %v1362
        %v1409 = vunpack.c.h.b16 %v1362
        %v1410 = vunpack.c.l.b16 %v1363
        %v1411 = vunpack.c.h.b16 %v1363
        %v1412 = vpack.c.b16 %v1380, %v1380
        %v1413 = vpack.c.b16 %v1381, %v1381
        %v1414 = vpack.c.b16 %v1382, %v1382
        %v1415 = vpack.c.b16 %v1383, %v1383
        %v1416 = vpack.c.b16 %v1384, %v1384
        %v1417 = vpack.c.b16 %v1385, %v1385
        %v1418 = vpack.c.b16 %v1386, %v1386
        %v1419 = vpack.c.b16 %v1387, %v1387
        %v1420 = vpack.c.b16 %v1388, %v1388
        %v1421 = vpack.c.b16 %v1389, %v1389
        %v1422 = vpack.c.b16 %v1390, %v1390
        %v1423 = vpack.c.b16 %v1391, %v1391
        %v1424 = vpack.c.b16 %v1392, %v1392
        %v1425 = vpack.c.b16 %v1393, %v1393
        %v1426 = vpack.c.b16 %v1394, %v1394
        %v1427 = vpack.c.b16 %v1395, %v1395
        %v1428 = vpack.c.b16 %v1396, %v1396
        %v1429 = vpack.c.b16 %v1397, %v1397
        %v1430 = vpack.c.b16 %v1398, %v1398
        %v1431 = vpack.c.b16 %v1399, %v1399
        %v1432 = vpack.c.b16 %v1400, %v1400
        %v1433 = vpack.c.b16 %v1401, %v1401
        %v1434 = vpack.c.b16 %v1402, %v1402
        %v1435 = vpack.c.b16 %v1403, %v1403
        %v1436 = vpack.c.b16 %v1404, %v1404
        %v1437 = vpack.c.b16 %v1405, %v1405
        %v1438 = vpack.c.b16 %v1406, %v1406
        %v1439 = vpack.c.b16 %v1407, %v1407
        %v1440 = vpack.c.b16 %v1408, %v1408
        %v1441 = vpack.c.b16 %v1409, %v1409
        %v1442 = vpack.c.b16 %v1410, %v1410
        %v1443 = vpack.c.b16 %v1411, %v1411
        %vm1476 = vcmask 125952
        %1477 = vst.msk [vmem:[%s262] sm:$0xf] %vm1476, %v1412
        %1478 = vst.msk [vmem:[%s262 + $0x4] sm:$0xf] %vm1476, %v1413
        %1479 = vst.msk [vmem:[%s262 + $0x8] sm:$0xf] %vm1476, %v1414
        %1480 = vst.msk [vmem:[%s262 + $0xc] sm:$0xf] %vm1476, %v1415
        %1481 = vst.msk [vmem:[%s262 + $0x10] sm:$0xf] %vm1476, %v1416
        %1482 = vst.msk [vmem:[%s262 + $0x14] sm:$0xf] %vm1476, %v1417
        %1483 = vst.msk [vmem:[%s262 + $0x18] sm:$0xf] %vm1476, %v1418
        %1484 = vst.msk [vmem:[%s262 + $0x1c] sm:$0xf] %vm1476, %v1419
        %1485 = vst.msk [vmem:[%s262 + $0x20] sm:$0xf] %vm1476, %v1420
        %1486 = vst.msk [vmem:[%s262 + $0x24] sm:$0xf] %vm1476, %v1421
        %1487 = vst.msk [vmem:[%s262 + $0x28] sm:$0xf] %vm1476, %v1422
        %1488 = vst.msk [vmem:[%s262 + $0x2c] sm:$0xf] %vm1476, %v1423
        %1489 = vst.msk [vmem:[%s262 + $0x30] sm:$0xf] %vm1476, %v1424
        %1490 = vst.msk [vmem:[%s262 + $0x34] sm:$0xf] %vm1476, %v1425
        %1491 = vst.msk [vmem:[%s262 + $0x38] sm:$0xf] %vm1476, %v1426
        %1492 = vst.msk [vmem:[%s262 + $0x3c] sm:$0xf] %vm1476, %v1427
        %1493 = vst.msk [vmem:[%s262 + $0x40] sm:$0xf] %vm1476, %v1428
        %1494 = vst.msk [vmem:[%s262 + $0x44] sm:$0xf] %vm1476, %v1429
        %1495 = vst.msk [vmem:[%s262 + $0x48] sm:$0xf] %vm1476, %v1430
        %1496 = vst.msk [vmem:[%s262 + $0x4c] sm:$0xf] %vm1476, %v1431
        %1497 = vst.msk [vmem:[%s262 + $0x50] sm:$0xf] %vm1476, %v1432
        %1498 = vst.msk [vmem:[%s262 + $0x54] sm:$0xf] %vm1476, %v1433
        %1499 = vst.msk [vmem:[%s262 + $0x58] sm:$0xf] %vm1476, %v1434
        %1500 = vst.msk [vmem:[%s262 + $0x5c] sm:$0xf] %vm1476, %v1435
        %1501 = vst.msk [vmem:[%s262 + $0x60] sm:$0xf] %vm1476, %v1436
        %1502 = vst.msk [vmem:[%s262 + $0x64] sm:$0xf] %vm1476, %v1437
        %1503 = vst.msk [vmem:[%s262 + $0x68] sm:$0xf] %vm1476, %v1438
        %1504 = vst.msk [vmem:[%s262 + $0x6c] sm:$0xf] %vm1476, %v1439
        %1505 = vst.msk [vmem:[%s262 + $0x70] sm:$0xf] %vm1476, %v1440
        %1506 = vst.msk [vmem:[%s262 + $0x74] sm:$0xf] %vm1476, %v1441
        %1507 = vst.msk [vmem:[%s262 + $0x78] sm:$0xf] %vm1476, %v1442
        %1508 = vst.msk [vmem:[%s262 + $0x7c] sm:$0xf] %vm1476, %v1443
        %p1509 = scmp.lt.s32.totalorder %s24, 1
        %s1510 = scalar_select %p1509, %s24, 1
        %s1511 = smul.addr %s1510, 32
        %s1512 = smul.addr %s1511, 4
        %s1513 = scalar_lea.vmem %s3, %s1512
        %s1514 = sand.u32 %s126, 1
        %s1515 = scalar_lea.sflag [#allocation3], %s1514
        %s1516 = sand.u32 %s126, 1
        %s1517 = smul.addr %s1516, 2
        %s1518 = scalar_lea.vmem [#allocation2], %s1517
        %s1519 = sand.u32 %s24, 1
        %s1520 = scalar_lea.sflag [#allocation5], %s1519
        %s1521 = sand.u32 %s152, 1
        %s1522 = smul.addr %s1521, 128
        %s1523 = scalar_lea.vmem [#allocation4], %s1522
        %s1524 = sand.u32 %s24, 1
        %s1525 = scalar_lea.sflag [#allocation5], %s1524
        %s1526 = sand.u32 %s178, 1
        %s1527 = smul.addr %s1526, 2
        %s1528 = scalar_lea.vmem [#allocation6], %s1527
        // Predicated region
        $region33: #{tpu_custom_call.1} parent=31 // pred_check
          %p1529 = pneg %p110
        $region34: #{tpu_custom_call.1} parent=31 // pred_check_branch
          %1531 = sbr.rel (%p1529) target = $region36
        $region35: #{tpu_custom_call.1} parent=31 // pred_region
          _
        $region36: #{tpu_custom_call.1} parent=31 // pred_fallthru
          _
        // Predicated region
        $region37: #{tpu_custom_call.1} parent=31 // pred_check
          %p1532 = pneg %p136
        $region38: #{tpu_custom_call.1} parent=31 // pred_check_branch
          %1534 = sbr.rel (%p1532) target = $region40
        $region39: #{tpu_custom_call.1} parent=31 // pred_region
          %s1536 = ssub.s32 32, 32
          %1537 = vsyncadd %s1515, %s1536
          %s1538 = smul.addr %s24, 32
          %s1539 = scalar_lea.hbm %s4, %s1538
          %s1541 = sshll.u32 %s1518, 4
          %s1542 = int_to_ptr.vmem [resolvable:$true] %s1541
          %1544 = dma.vmem_to_hbm [thread:$0]  %s1542, 32, %s1539, %s1515
        $region40: #{tpu_custom_call.1} parent=31 // pred_fallthru
          _
        // Predicated region
        $region41: #{tpu_custom_call.1} parent=31 // pred_check
          %p1545 = pneg %p162
        $region42: #{tpu_custom_call.1} parent=31 // pred_check_branch
          %1547 = sbr.rel (%p1545) target = $region44
        $region43: #{tpu_custom_call.1} parent=31 // pred_region
          %s1549 = ssub.s32 2048, 2048
          %1550 = vsyncadd %s1520, %s1549
          %s1551 = smul.addr %s24, 32
          %s1552 = smul.addr %s1551, 64
          %s1553 = scalar_lea.hbm %s5, %s1552
          %s1554 = sshll.u32 %s1523, 4
          %s1555 = int_to_ptr.vmem [resolvable:$true] %s1554
          %1560 = dma.vmem_to_hbm [thread:$0]  %s1555, 2048, %s1553, %s1520, 64, 64, 4
        $region44: #{tpu_custom_call.1} parent=31 // pred_fallthru
          _
        // Predicated region
        $region45: #{tpu_custom_call.1} parent=31 // pred_check
          %p1561 = pneg %p188
        $region46: #{tpu_custom_call.1} parent=31 // pred_check_branch
          %1563 = sbr.rel (%p1561) target = $region48
        $region47: #{tpu_custom_call.1} parent=31 // pred_region
          %s1565 = ssub.s32 32, 32
          %1566 = vsyncadd %s1525, %s1565
          %s1567 = smul.addr %s24, 32
          %s1568 = scalar_lea.hbm %s6, %s1567
          %s1570 = sshll.u32 %s1528, 4
          %s1571 = int_to_ptr.vmem [resolvable:$true] %s1570
          %1573 = dma.vmem_to_hbm [thread:$0]  %s1571, 32, %s1568, %s1525
        $region48: #{tpu_custom_call.1} parent=31 // pred_fallthru
          _
      $region32: #{tpu_custom_call.1} parent=5 // pred_fallthru
        _
      %p1574 = scmp.le.s32.totalorder 2, %s19
      // Predicated region
      $region49: #{tpu_custom_call.1} parent=5 // pred_check
        %p1575 = pneg %p1574
      $region50: #{tpu_custom_call.1} parent=5 // pred_check_branch
        %1577 = sbr.rel (%p1575) target = $region52
      $region51: #{tpu_custom_call.1} parent=5 // pred_region
        %s1578 = ssub.s32 %s19, 2
        // Predicated region
        $region53: #{tpu_custom_call.1} parent=51 // pred_check
          %p1579 = pneg %p116
        $region54: #{tpu_custom_call.1} parent=51 // pred_check_branch
          %1581 = sbr.rel (%p1579) target = $region56
        $region55: #{tpu_custom_call.1} parent=51 // pred_region
          %p1582 = scmp.lt.s32.totalorder %s25, 1
          %s1583 = scalar_select %p1582, %s25, 1
          %s1584 = smul.addr %s1583, 32
          %s1585 = smul.addr %s1584, 4
          %s1586 = scalar_lea.vmem %s3, %s1585
        $region56: #{tpu_custom_call.1} parent=51 // pred_fallthru
          _
        // Predicated region
        $region57: #{tpu_custom_call.1} parent=51 // pred_check
          %p1587 = pneg %p142
        $region58: #{tpu_custom_call.1} parent=51 // pred_check_branch
          %1589 = sbr.rel (%p1587) target = $region60
        $region59: #{tpu_custom_call.1} parent=51 // pred_region
          %s1590 = sand.u32 %s127, 1
          %s1591 = scalar_lea.sflag [#allocation3], %s1590
          %s1592 = sand.u32 %s127, 1
          %s1593 = smul.addr %s1592, 2
          %s1594 = scalar_lea.vmem [#allocation2], %s1593
          %1595 = dma.done %s1591, 32
        $region60: #{tpu_custom_call.1} parent=51 // pred_fallthru
          _
        // Predicated region
        $region61: #{tpu_custom_call.1} parent=51 // pred_check
          %p1596 = pneg %p168
        $region62: #{tpu_custom_call.1} parent=51 // pred_check_branch
          %1598 = sbr.rel (%p1596) target = $region64
        $region63: #{tpu_custom_call.1} parent=51 // pred_region
          %s1599 = sand.u32 %s25, 1
          %s1600 = scalar_lea.sflag [#allocation5], %s1599
          %s1601 = sand.u32 %s153, 1
          %s1602 = smul.addr %s1601, 128
          %s1603 = scalar_lea.vmem [#allocation4], %s1602
          %1604 = dma.done %s1600, 2048
        $region64: #{tpu_custom_call.1} parent=51 // pred_fallthru
          _
        // Predicated region
        $region65: #{tpu_custom_call.1} parent=51 // pred_check
          %p1605 = pneg %p194
        $region66: #{tpu_custom_call.1} parent=51 // pred_check_branch
          %1607 = sbr.rel (%p1605) target = $region68
        $region67: #{tpu_custom_call.1} parent=51 // pred_region
          %s1608 = sand.u32 %s25, 1
          %s1609 = scalar_lea.sflag [#allocation5], %s1608
          %s1610 = sand.u32 %s179, 1
          %s1611 = smul.addr %s1610, 2
          %s1612 = scalar_lea.vmem [#allocation6], %s1611
          %1613 = dma.done %s1609, 32
        $region68: #{tpu_custom_call.1} parent=51 // pred_fallthru
          _
      $region52: #{tpu_custom_call.1} parent=5 // pred_fallthru
        _
    $region6: #{tpu_custom_call.1} parent=1 // loop_footer
      %s23 = sadd.s32 1, %s19
    $region7: #{tpu_custom_call.1} parent=1 // loop_footer_branch
      %18 = sbr.rel target = $region3
    $region8: #{tpu_custom_call.1} parent=1 // loop_exit
      _
    %1614 = vsyncpa [#allocation3], 1
    %s1615 = scalar_lea.sflag [#allocation3], 1
    %1616 = vsyncpa %s1615, 1
    %1617 = vsyncpa [#allocation5], 1
    %s1618 = scalar_lea.sflag [#allocation5], 1
    %1619 = vsyncpa %s1618, 1

</llo_original>
